<compile_context>
chip_gen: v7x
topology: tpu7x:2x2x1
jax: 0.10.0
libtpu: 0.0.40
codegen_flags: <defaults>
</compile_context>

<pallas_src>
import math

import jax
import jax.numpy as jnp
from jax.experimental import pallas as pl
from jax.experimental.pallas import tpu as pltpu

_HALF_LOG_2PI = 0.5 * math.log(2.0 * math.pi)


def ppo_actor_kernel(x_ref, xr_ref, ur_ref,
                     w1x_ref, w1r_ref, w1u_ref, b1_ref,
                     w2_ref, b2_ref, w3_ref, b3_ref,
                     std_ref, lpc_ref, eps_ref,
                     out_ref):
    f32 = jnp.float32
    a_dim = w3_ref.shape[1]

    # --- MLP hot path: fused "concat" via split-W1 matmuls (MXU), f32 accum ---
    z1 = (jnp.dot(x_ref[...], w1x_ref[...], preferred_element_type=f32)
          + jnp.dot(xr_ref[...], w1r_ref[...], preferred_element_type=f32)
          + jnp.dot(ur_ref[...], w1u_ref[...], preferred_element_type=f32)
          + b1_ref[...])
    h1 = jnp.tanh(z1)
    h2 = jnp.tanh(jnp.dot(h1, w2_ref[...], preferred_element_type=f32)
                  + b2_ref[...])
    mu = jnp.dot(h2, w3_ref[...], preferred_element_type=f32) + b3_ref[...]

    # --- Normal distribution: rsample + log_prob (entropy handled in wrapper) ---
    eps = eps_ref[...]                          # [tb, a_dim] standard-normal noise
    a = mu + std_ref[...] * eps                 # std [1, a_dim] broadcasts over batch

    # log N(a | mu, std) summed over action dims; (a - mu)/std == eps exactly, so
    #   logp = -0.5 * sum(eps^2) - (sum(logstd) + a_dim * 0.5*log(2*pi))
    # the second term is the precomputed constant lpc_ref (hoisted to the wrapper).
    logp = -0.5 * jnp.sum(eps * eps, axis=1, keepdims=True) - lpc_ref[...]  # [tb, 1]
    probs = jnp.exp(logp)

    # --- epilogue: direct static-offset sub-slice stores (no concat, no zero pad) ---
    out_ref[:, 0:a_dim] = a
    out_ref[:, a_dim:2 * a_dim] = mu
    out_ref[:, 2 * a_dim:2 * a_dim + 1] = logp
    out_ref[:, 2 * a_dim + 1:2 * a_dim + 2] = probs


def _choose_tile_b(B, max_tile=1024, min_tiles=4):
    """Adaptive batch tile: one tile for small B; >=min_tiles tiles for large B."""
    if B <= max_tile:
        return B                       # grid=(1,), block == full array (always legal)
    tile = min(max_tile, -(-B // min_tiles))   # ceil(B / min_tiles)
    tile = max(8, (tile // 8) * 8)             # multiple of 8 (sublane rule)
    return tile


def ppo_actor_forward(x, xref, uref, params, eps, *,
                      x_trim=None, xref_trim=None, deterministic=False,
                      max_tile_b=1024):
    """Calls the Pallas kernel. x_trim/xref_trim/deterministic are accepted for
    interface parity with the torch module but (as in the reference forward)
    are unused."""
    del x_trim, xref_trim, deterministic
    w1, b1, w2, b2, w3, b3, logstd = params
    x_dim, xr_dim, ur_dim = x.shape[1], xref.shape[1], uref.shape[1]
    a_dim = w3.shape[1]
    used = 2 * a_dim + 2                      # a | mu | logp | probs

    f32 = jnp.float32
    x = x.astype(f32); xref = xref.astype(f32)
    uref = uref.astype(f32); eps = eps.astype(f32)
    w1 = w1.astype(f32); w2 = w2.astype(f32); w3 = w3.astype(f32)
    b1 = b1.astype(f32); b2 = b2.astype(f32); b3 = b3.astype(f32)
    logstd = logstd.astype(f32)

    # Static slices of W1 replace the state concat; `state` never hits HBM.
    w1x = w1[:x_dim]
    w1r = w1[x_dim:x_dim + xr_dim]
    w1u = w1[x_dim + xr_dim:]

    # Hoisted distribution constants (parameter-sized, computed once per call).
    std = jnp.exp(logstd)                                    # [1, a_dim]
    sum_logstd = jnp.sum(logstd)
    logp_const = jnp.reshape(sum_logstd + a_dim * _HALF_LOG_2PI, (1, 1))

    B = x.shape[0]
    tile_b = _choose_tile_b(B, max_tile_b)
    num_tiles = pl.cdiv(B, tile_b)

    def row_spec(d):                  # batch-tiled arrays
        return pl.BlockSpec((tile_b, d), lambda i: (i, 0))

    def pinned(shape):                # weights / biases / constants: DMA'd once
        return pl.BlockSpec(shape, lambda i: (0, 0))

    out = pl.pallas_call(
        ppo_actor_kernel,
        grid=(num_tiles,),
        in_specs=[row_spec(x_dim), row_spec(xr_dim), row_spec(ur_dim),
                  pinned(w1x.shape), pinned(w1r.shape), pinned(w1u.shape),
                  pinned(b1.shape), pinned(w2.shape), pinned(b2.shape),
                  pinned(w3.shape), pinned(b3.shape),
                  pinned(std.shape), pinned(logp_const.shape),
                  row_spec(a_dim)],
        out_specs=pl.BlockSpec((tile_b, used), lambda i: (i, 0)),
        out_shape=jax.ShapeDtypeStruct((B, used), f32),
        compiler_params=pltpu.CompilerParams(
            dimension_semantics=("parallel",)),
    )(x, xref, uref, w1x, w1r, w1u, b1, w2, b2, w3, b3, std, logp_const, eps)

    a = out[:, 0:a_dim]
    mu = out[:, a_dim:2 * a_dim]
    logp = out[:, 2 * a_dim:2 * a_dim + 1]
    probs = out[:, 2 * a_dim + 1:2 * a_dim + 2]

    # Entropy of a diagonal Normal is batch-constant: a_dim*(0.5+0.5*log(2pi)) + sum(logstd).
    ent_scalar = a_dim * (0.5 + _HALF_LOG_2PI) + sum_logstd
    entropy = jnp.broadcast_to(ent_scalar, (B,))

    info = {
        "dist": {"loc": mu, "scale": std},   # Normal(loc, scale); scale is the
                                             # unbroadcast [1, a_dim] exp(logstd)
        "probs": probs,
        "logprobs": logp,
        "entropy": entropy,
    }
    return a, info


def init_params(key, input_dim, hidden_dim, a_dim):
    """Deterministic parameter init (MLP with 'actor' head; logstd starts at zeros)."""
    dims = [input_dim] + list(hidden_dim) + [a_dim]
    keys = jax.random.split(key, 2 * (len(dims) - 1))
    ws, bs = [], []
    for i, (d_in, d_out) in enumerate(zip(dims[:-1], dims[1:])):
        ws.append(jax.random.normal(keys[2 * i], (d_in, d_out), jnp.float32)
                  * (1.0 / jnp.sqrt(d_in)))
        bs.append(0.1 * jax.random.normal(keys[2 * i + 1], (1, d_out), jnp.float32))
    logstd = jnp.zeros((1, a_dim), jnp.float32)
    return (ws[0], bs[0], ws[1], bs[1], ws[2], bs[2], logstd)


def _ref_forward(x, xref, uref, params, eps):
    """Pure-JAX reference of PPO_Actor.forward."""
    w1, b1, w2, b2, w3, b3, logstd = params
    state = jnp.concatenate([x, xref, uref], axis=-1)
    h = jnp.tanh(state @ w1 + b1)
    h = jnp.tanh(h @ w2 + b2)
    mu = h @ w3 + b3
    std = jnp.exp(jnp.broadcast_to(logstd, mu.shape))
    a = mu + std * eps
    logp = jnp.sum(-0.5 * ((a - mu) / std) ** 2 - jnp.log(std) - _HALF_LOG_2PI,
                   axis=1, keepdims=True)
    ent = jnp.sum(0.5 + _HALF_LOG_2PI + jnp.log(std), axis=1)
    return a, mu, logp, jnp.exp(logp), ent


def _check(a, info, refs):
    a_ref, mu_ref, logp_ref, probs_ref, ent_ref = refs
    assert jnp.allclose(a, a_ref, atol=1e-4), "action mismatch"
    assert jnp.allclose(info["dist"]["loc"], mu_ref, atol=1e-4), "mu mismatch"
    assert jnp.allclose(info["logprobs"], logp_ref, atol=1e-4), "logprob mismatch"
    assert jnp.allclose(info["probs"], probs_ref, atol=1e-5), "probs mismatch"
    assert jnp.allclose(info["entropy"], ent_ref, atol=1e-5), "entropy mismatch"


if __name__ == "__main__":
    key = jax.random.PRNGKey(0)
    k_x, k_xref, k_uref, k_eps, k_param, k_ls, k_big = jax.random.split(key, 7)

    # x_dim=6, xref_dim=6, uref_dim=4 -> input_dim=16; hidden [32, 32]; a_dim=4.
    x_dim, xref_dim, uref_dim = 6, 6, 4
    hidden_dim = [32, 32]
    a_dim = 4
    input_dim = x_dim + xref_dim + uref_dim

    params = init_params(k_param, input_dim, hidden_dim, a_dim)
    # Use a non-zero logstd so the std / logp / entropy math is exercised
    # (the module itself initializes logstd to zeros).
    logstd = 0.1 * jax.random.normal(k_ls, (1, a_dim), jnp.float32)
    params = params[:-1] + (logstd,)

    # --- test 1: small batch -> single-tile path (grid=(1,), no padding) ---
    B = 256
    x = jax.random.normal(k_x, (B, x_dim), jnp.float32)
    xref = jax.random.normal(k_xref, (B, xref_dim), jnp.float32)
    uref = jax.random.normal(k_uref, (B, uref_dim), jnp.float32)
    eps = jax.random.normal(k_eps, (B, a_dim), jnp.float32)   # rsample noise

    a, info = ppo_actor_forward(x, xref, uref, params, eps)
    jax.block_until_ready((a, info))
    _check(a, info, _ref_forward(x, xref, uref, params, eps))

    # --- test 2: larger batch -> multi-tile path (4 tiles of 512, "parallel") ---
    B2 = 2048
    kx2, kr2, ku2, ke2 = jax.random.split(k_big, 4)
    x2 = jax.random.normal(kx2, (B2, x_dim), jnp.float32)
    xref2 = jax.random.normal(kr2, (B2, xref_dim), jnp.float32)
    uref2 = jax.random.normal(ku2, (B2, uref_dim), jnp.float32)
    eps2 = jax.random.normal(ke2, (B2, a_dim), jnp.float32)

    a2, info2 = ppo_actor_forward(x2, xref2, uref2, params, eps2, max_tile_b=512)
    jax.block_until_ready((a2, info2))
    _check(a2, info2, _ref_forward(x2, xref2, uref2, params, eps2))

    print("KERNEL_OK")
</pallas_src>

<mosaic_0001>
module attributes {stable_mosaic.version = 11 : i64} {
  func.func @ppo_actor_kernel(%arg0: i32, %arg1: memref<256x6xf32, #tpu.memory_space<vmem>>, %arg2: memref<256x6xf32, #tpu.memory_space<vmem>>, %arg3: memref<256x4xf32, #tpu.memory_space<vmem>>, %arg4: memref<6x32xf32, #tpu.memory_space<vmem>>, %arg5: memref<6x32xf32, #tpu.memory_space<vmem>>, %arg6: memref<4x32xf32, #tpu.memory_space<vmem>>, %arg7: memref<1x32xf32, #tpu.memory_space<vmem>>, %arg8: memref<32x32xf32, #tpu.memory_space<vmem>>, %arg9: memref<1x32xf32, #tpu.memory_space<vmem>>, %arg10: memref<32x4xf32, #tpu.memory_space<vmem>>, %arg11: memref<1x4xf32, #tpu.memory_space<vmem>>, %arg12: memref<1x4xf32, #tpu.memory_space<vmem>>, %arg13: memref<1x1xf32, #tpu.memory_space<vmem>>, %arg14: memref<256x4xf32, #tpu.memory_space<vmem>>, %arg15: memref<256x10xf32, #tpu.memory_space<vmem>>) attributes {dimension_semantics = [#tpu.dimension_semantics<parallel>], iteration_bounds = array<i64: 1>, scalar_prefetch = 0 : i64, scratch_operands = 0 : i64, tpu.core_type = #tpu.core_type<tc>, window_params = [{transform_indices = @transform_0, window_bounds = array<i64: 256, 6>}, {transform_indices = @transform_1, window_bounds = array<i64: 256, 6>}, {transform_indices = @transform_2, window_bounds = array<i64: 256, 4>}, {pipeline_mode = #tpu.pipeline_mode<synchronous>, transform_indices = @transform_3, window_bounds = array<i64: 6, 32>}, {pipeline_mode = #tpu.pipeline_mode<synchronous>, transform_indices = @transform_4, window_bounds = array<i64: 6, 32>}, {pipeline_mode = #tpu.pipeline_mode<synchronous>, transform_indices = @transform_5, window_bounds = array<i64: 4, 32>}, {pipeline_mode = #tpu.pipeline_mode<synchronous>, transform_indices = @transform_6, window_bounds = array<i64: 1, 32>}, {pipeline_mode = #tpu.pipeline_mode<synchronous>, transform_indices = @transform_7, window_bounds = array<i64: 32, 32>}, {pipeline_mode = #tpu.pipeline_mode<synchronous>, transform_indices = @transform_8, window_bounds = array<i64: 1, 32>}, {pipeline_mode = #tpu.pipeline_mode<synchronous>, transform_indices = @transform_9, window_bounds = array<i64: 32, 4>}, {pipeline_mode = #tpu.pipeline_mode<synchronous>, transform_indices = @transform_10, window_bounds = array<i64: 1, 4>}, {pipeline_mode = #tpu.pipeline_mode<synchronous>, transform_indices = @transform_11, window_bounds = array<i64: 1, 4>}, {pipeline_mode = #tpu.pipeline_mode<synchronous>, transform_indices = @transform_12, window_bounds = array<i64: 1, 1>}, {transform_indices = @transform_13, window_bounds = array<i64: 256, 4>}, {transform_indices = @transform_14, window_bounds = array<i64: 256, 10>}]} {
    %c0 = arith.constant 0 : index
    %c0_0 = arith.constant 0 : index
    %0 = vector.load %arg1[%c0, %c0_0] : memref<256x6xf32, #tpu.memory_space<vmem>>, vector<256x6xf32>
    %c0_1 = arith.constant 0 : index
    %c0_2 = arith.constant 0 : index
    %1 = vector.load %arg4[%c0_1, %c0_2] : memref<6x32xf32, #tpu.memory_space<vmem>>, vector<6x32xf32>
    %cst = arith.constant dense<0.000000e+00> : vector<256x32xf32>
    %2 = tpu.matmul %0, %1, %cst {dimension_numbers = #tpu.dot_dimension_numbers<[1], [0], [0], [1], [0, 0, 1, 1], [], []>} : vector<256x6xf32>, vector<6x32xf32>, vector<256x32xf32> -> vector<256x32xf32>
    %c0_3 = arith.constant 0 : index
    %c0_4 = arith.constant 0 : index
    %3 = vector.load %arg2[%c0_3, %c0_4] : memref<256x6xf32, #tpu.memory_space<vmem>>, vector<256x6xf32>
    %c0_5 = arith.constant 0 : index
    %c0_6 = arith.constant 0 : index
    %4 = vector.load %arg5[%c0_5, %c0_6] : memref<6x32xf32, #tpu.memory_space<vmem>>, vector<6x32xf32>
    %cst_7 = arith.constant dense<0.000000e+00> : vector<256x32xf32>
    %5 = tpu.matmul %3, %4, %cst_7 {dimension_numbers = #tpu.dot_dimension_numbers<[1], [0], [0], [1], [0, 0, 1, 1], [], []>} : vector<256x6xf32>, vector<6x32xf32>, vector<256x32xf32> -> vector<256x32xf32>
    %6 = arith.addf %2, %5 : vector<256x32xf32>
    %c0_8 = arith.constant 0 : index
    %c0_9 = arith.constant 0 : index
    %7 = vector.load %arg3[%c0_8, %c0_9] : memref<256x4xf32, #tpu.memory_space<vmem>>, vector<256x4xf32>
    %c0_10 = arith.constant 0 : index
    %c0_11 = arith.constant 0 : index
    %8 = vector.load %arg6[%c0_10, %c0_11] : memref<4x32xf32, #tpu.memory_space<vmem>>, vector<4x32xf32>
    %cst_12 = arith.constant dense<0.000000e+00> : vector<256x32xf32>
    %9 = tpu.matmul %7, %8, %cst_12 {dimension_numbers = #tpu.dot_dimension_numbers<[1], [0], [0], [1], [0, 0, 1, 1], [], []>} : vector<256x4xf32>, vector<4x32xf32>, vector<256x32xf32> -> vector<256x32xf32>
    %10 = arith.addf %6, %9 : vector<256x32xf32>
    %c0_13 = arith.constant 0 : index
    %c0_14 = arith.constant 0 : index
    %11 = vector.load %arg7[%c0_13, %c0_14] : memref<1x32xf32, #tpu.memory_space<vmem>>, vector<1x32xf32>
    %12 = vector.broadcast %11 : vector<1x32xf32> to vector<256x32xf32>
    %13 = arith.addf %10, %12 : vector<256x32xf32>
    %14 = math.tanh %13 : vector<256x32xf32>
    %c0_15 = arith.constant 0 : index
    %c0_16 = arith.constant 0 : index
    %15 = vector.load %arg8[%c0_15, %c0_16] : memref<32x32xf32, #tpu.memory_space<vmem>>, vector<32x32xf32>
    %cst_17 = arith.constant dense<0.000000e+00> : vector<256x32xf32>
    %16 = tpu.matmul %14, %15, %cst_17 {dimension_numbers = #tpu.dot_dimension_numbers<[1], [0], [0], [1], [0, 0, 1, 1], [], []>} : vector<256x32xf32>, vector<32x32xf32>, vector<256x32xf32> -> vector<256x32xf32>
    %c0_18 = arith.constant 0 : index
    %c0_19 = arith.constant 0 : index
    %17 = vector.load %arg9[%c0_18, %c0_19] : memref<1x32xf32, #tpu.memory_space<vmem>>, vector<1x32xf32>
    %18 = vector.broadcast %17 : vector<1x32xf32> to vector<256x32xf32>
    %19 = arith.addf %16, %18 : vector<256x32xf32>
    %20 = math.tanh %19 : vector<256x32xf32>
    %c0_20 = arith.constant 0 : index
    %c0_21 = arith.constant 0 : index
    %21 = vector.load %arg10[%c0_20, %c0_21] : memref<32x4xf32, #tpu.memory_space<vmem>>, vector<32x4xf32>
    %cst_22 = arith.constant dense<0.000000e+00> : vector<256x4xf32>
    %22 = tpu.matmul %20, %21, %cst_22 {dimension_numbers = #tpu.dot_dimension_numbers<[1], [0], [0], [1], [0, 0, 1, 1], [], []>} : vector<256x32xf32>, vector<32x4xf32>, vector<256x4xf32> -> vector<256x4xf32>
    %c0_23 = arith.constant 0 : index
    %c0_24 = arith.constant 0 : index
    %23 = vector.load %arg11[%c0_23, %c0_24] : memref<1x4xf32, #tpu.memory_space<vmem>>, vector<1x4xf32>
    %24 = vector.broadcast %23 : vector<1x4xf32> to vector<256x4xf32>
    %25 = arith.addf %22, %24 : vector<256x4xf32>
    %c0_25 = arith.constant 0 : index
    %c0_26 = arith.constant 0 : index
    %26 = vector.load %arg14[%c0_25, %c0_26] : memref<256x4xf32, #tpu.memory_space<vmem>>, vector<256x4xf32>
    %c0_27 = arith.constant 0 : index
    %c0_28 = arith.constant 0 : index
    %27 = vector.load %arg12[%c0_27, %c0_28] : memref<1x4xf32, #tpu.memory_space<vmem>>, vector<1x4xf32>
    %28 = vector.broadcast %27 : vector<1x4xf32> to vector<256x4xf32>
    %29 = arith.mulf %28, %26 : vector<256x4xf32>
    %30 = arith.addf %25, %29 : vector<256x4xf32>
    %31 = arith.mulf %26, %26 : vector<256x4xf32>
    %cst_29 = arith.constant dense<0.000000e+00> : vector<256xf32>
    %32 = vector.multi_reduction <add>, %31, %cst_29 [1] : vector<256x4xf32> to vector<256xf32>
    %33 = vector.shape_cast %32 : vector<256xf32> to vector<256x1xf32>
    %cst_30 = arith.constant -5.000000e-01 : f32
    %34 = vector.broadcast %cst_30 : f32 to vector<256x1xf32>
    %35 = arith.mulf %34, %33 : vector<256x1xf32>
    %c0_31 = arith.constant 0 : index
    %c0_32 = arith.constant 0 : index
    %36 = vector.load %arg13[%c0_31, %c0_32] : memref<1x1xf32, #tpu.memory_space<vmem>>, vector<1x1xf32>
    %37 = vector.broadcast %36 : vector<1x1xf32> to vector<256x1xf32>
    %38 = arith.subf %35, %37 : vector<256x1xf32>
    %39 = math.exp %38 : vector<256x1xf32>
    %c0_33 = arith.constant 0 : index
    %c0_34 = arith.constant 0 : index
    %40 = vector.load %arg15[%c0_33, %c0_34] : memref<256x10xf32, #tpu.memory_space<vmem>>, vector<256x4xf32>
    tpu.vector_store %arg15[%c0_33, %c0_34], %30 {strides = array<i32>} : memref<256x10xf32, #tpu.memory_space<vmem>>, vector<256x4xf32>,
    %c0_35 = arith.constant 0 : index
    %c4 = arith.constant 4 : index
    %41 = vector.load %arg15[%c0_35, %c4] : memref<256x10xf32, #tpu.memory_space<vmem>>, vector<256x4xf32>
    tpu.vector_store %arg15[%c0_35, %c4], %25 {strides = array<i32>} : memref<256x10xf32, #tpu.memory_space<vmem>>, vector<256x4xf32>,
    %c0_36 = arith.constant 0 : index
    %c8 = arith.constant 8 : index
    %42 = vector.load %arg15[%c0_36, %c8] : memref<256x10xf32, #tpu.memory_space<vmem>>, vector<256x1xf32>
    tpu.vector_store %arg15[%c0_36, %c8], %38 {strides = array<i32>} : memref<256x10xf32, #tpu.memory_space<vmem>>, vector<256x1xf32>,
    %c0_37 = arith.constant 0 : index
    %c9 = arith.constant 9 : index
    %43 = vector.load %arg15[%c0_37, %c9] : memref<256x10xf32, #tpu.memory_space<vmem>>, vector<256x1xf32>
    tpu.vector_store %arg15[%c0_37, %c9], %39 {strides = array<i32>} : memref<256x10xf32, #tpu.memory_space<vmem>>, vector<256x1xf32>,
    return
  }
  func.func @transform_0(%arg0: i32) -> (i32, i32) {
    %c0_i32 = arith.constant 0 : i32
    %c0_i32_0 = arith.constant 0 : i32
    return %arg0, %c0_i32 : i32, i32
  }
  func.func @transform_1(%arg0: i32) -> (i32, i32) {
    %c0_i32 = arith.constant 0 : i32
    %c0_i32_0 = arith.constant 0 : i32
    return %arg0, %c0_i32 : i32, i32
  }
  func.func @transform_2(%arg0: i32) -> (i32, i32) {
    %c0_i32 = arith.constant 0 : i32
    %c0_i32_0 = arith.constant 0 : i32
    return %arg0, %c0_i32 : i32, i32
  }
  func.func @transform_3(%arg0: i32) -> (i32, i32) {
    %c0_i32 = arith.constant 0 : i32
    %c0_i32_0 = arith.constant 0 : i32
    %c0_i32_1 = arith.constant 0 : i32
    return %c0_i32, %c0_i32_0 : i32, i32
  }
  func.func @transform_4(%arg0: i32) -> (i32, i32) {
    %c0_i32 = arith.constant 0 : i32
    %c0_i32_0 = arith.constant 0 : i32
    %c0_i32_1 = arith.constant 0 : i32
    return %c0_i32, %c0_i32_0 : i32, i32
  }
  func.func @transform_5(%arg0: i32) -> (i32, i32) {
    %c0_i32 = arith.constant 0 : i32
    %c0_i32_0 = arith.constant 0 : i32
    %c0_i32_1 = arith.constant 0 : i32
    return %c0_i32, %c0_i32_0 : i32, i32
  }
  func.func @transform_6(%arg0: i32) -> (i32, i32) {
    %c0_i32 = arith.constant 0 : i32
    %c0_i32_0 = arith.constant 0 : i32
    %c0_i32_1 = arith.constant 0 : i32
    return %c0_i32, %c0_i32_0 : i32, i32
  }
  func.func @transform_7(%arg0: i32) -> (i32, i32) {
    %c0_i32 = arith.constant 0 : i32
    %c0_i32_0 = arith.constant 0 : i32
    %c0_i32_1 = arith.constant 0 : i32
    return %c0_i32, %c0_i32_0 : i32, i32
  }
  func.func @transform_8(%arg0: i32) -> (i32, i32) {
    %c0_i32 = arith.constant 0 : i32
    %c0_i32_0 = arith.constant 0 : i32
    %c0_i32_1 = arith.constant 0 : i32
    return %c0_i32, %c0_i32_0 : i32, i32
  }
  func.func @transform_9(%arg0: i32) -> (i32, i32) {
    %c0_i32 = arith.constant 0 : i32
    %c0_i32_0 = arith.constant 0 : i32
    %c0_i32_1 = arith.constant 0 : i32
    return %c0_i32, %c0_i32_0 : i32, i32
  }
  func.func @transform_10(%arg0: i32) -> (i32, i32) {
    %c0_i32 = arith.constant 0 : i32
    %c0_i32_0 = arith.constant 0 : i32
    %c0_i32_1 = arith.constant 0 : i32
    return %c0_i32, %c0_i32_0 : i32, i32
  }
  func.func @transform_11(%arg0: i32) -> (i32, i32) {
    %c0_i32 = arith.constant 0 : i32
    %c0_i32_0 = arith.constant 0 : i32
    %c0_i32_1 = arith.constant 0 : i32
    return %c0_i32, %c0_i32_0 : i32, i32
  }
  func.func @transform_12(%arg0: i32) -> (i32, i32) {
    %c0_i32 = arith.constant 0 : i32
    %c0_i32_0 = arith.constant 0 : i32
    %c0_i32_1 = arith.constant 0 : i32
    return %c0_i32, %c0_i32_0 : i32, i32
  }
  func.func @transform_13(%arg0: i32) -> (i32, i32) {
    %c0_i32 = arith.constant 0 : i32
    %c0_i32_0 = arith.constant 0 : i32
    return %arg0, %c0_i32 : i32, i32
  }
  func.func @transform_14(%arg0: i32) -> (i32, i32) {
    %c0_i32 = arith.constant 0 : i32
    %c0_i32_0 = arith.constant 0 : i32
    return %arg0, %c0_i32 : i32, i32
  }
}

</mosaic_0001>

<llo_original>
// kernel: tpu_custom_call.1
$region0: #{tpu_custom_call.1}
  #allocation0 [shape = 'u32[]', space=smem, size = 0x4, offset = 0x4, fixed_abs, tag = 'smem constant byte address 0x4 - core index']
  #allocation1 [shape = 'u32[144,128]{1,0:T(1,128)}', space=vmem, size = 0x12000, scoped, tag = 'internal scratch']
  #allocation2 [shape = 'f32[1,1]{1,0:T(1,128)S(1)}', space=vmem, size = 0x200, scoped, tag = 'scoped memory for tpu_custom_call.1']
  %s0 = inlined_call_operand.vmem [shape: f32[256,6], index: 0, kind: input, shape index: {}]
  %s1 = inlined_call_operand.vmem [shape: f32[256,6], index: 1, kind: input, shape index: {}]
  %s2 = inlined_call_operand.vmem [shape: f32[256,4], index: 2, kind: input, shape index: {}]
  %s3 = inlined_call_operand.vmem [shape: f32[6,32], index: 3, kind: input, shape index: {}]
  %s4 = inlined_call_operand.vmem [shape: f32[6,32], index: 4, kind: input, shape index: {}]
  %s5 = inlined_call_operand.vmem [shape: f32[4,32], index: 5, kind: input, shape index: {}]
  %s6 = inlined_call_operand.vmem [shape: f32[1,32], index: 6, kind: input, shape index: {}]
  %s7 = inlined_call_operand.vmem [shape: f32[32,32], index: 7, kind: input, shape index: {}]
  %s8 = inlined_call_operand.vmem [shape: f32[1,32], index: 8, kind: input, shape index: {}]
  %s9 = inlined_call_operand.vmem [shape: f32[32,4], index: 9, kind: input, shape index: {}]
  %s10 = inlined_call_operand.vmem [shape: f32[1,4], index: 10, kind: input, shape index: {}]
  %s11 = inlined_call_operand.vmem [shape: f32[1,4], index: 11, kind: input, shape index: {}]
  %s12 = inlined_call_operand.<no memory space> [shape: f32[1,1], index: 12, kind: input, shape index: {}]
  %s13 = inlined_call_operand.vmem [shape: f32[256,4], index: 13, kind: input, shape index: {}]
  %s14 = inlined_call_operand.vmem [shape: f32[256,10], index: 14, kind: output, shape index: {}]
  %s15 = sld [smem:[#allocation0]]
  $region66: #{tpu_custom_call.1} parent=0
    _
  %s17 = ssub.s32 1, %s15
  %s18 = scalar_select 0, %s17, %s15
  %v19 = vstv %s12
  %20 = vst [vmem:[#allocation2] sm:$0x1] %v19
  // Predicated region
  $region2: #{tpu_custom_call.1} parent=0 // pred_check
    _
  $region3: #{tpu_custom_call.1} parent=0 // pred_check_branch
    %22 = sbr.rel (0) target = $region5
  $region4: #{tpu_custom_call.1} parent=0 // pred_region
    _
  $region5: #{tpu_custom_call.1} parent=0 // pred_fallthru
    _
  // Predicated region
  $region6: #{tpu_custom_call.1} parent=0 // pred_check
    _
  $region7: #{tpu_custom_call.1} parent=0 // pred_check_branch
    %24 = sbr.rel (0) target = $region9
  $region8: #{tpu_custom_call.1} parent=0 // pred_region
    _
  $region9: #{tpu_custom_call.1} parent=0 // pred_fallthru
    _
  // Predicated region
  $region10: #{tpu_custom_call.1} parent=0 // pred_check
    _
  $region11: #{tpu_custom_call.1} parent=0 // pred_check_branch
    %26 = sbr.rel (0) target = $region13
  $region12: #{tpu_custom_call.1} parent=0 // pred_region
    _
  $region13: #{tpu_custom_call.1} parent=0 // pred_fallthru
    _
  // Predicated region
  $region14: #{tpu_custom_call.1} parent=0 // pred_check
    _
  $region15: #{tpu_custom_call.1} parent=0 // pred_check_branch
    %28 = sbr.rel (0) target = $region17
  $region16: #{tpu_custom_call.1} parent=0 // pred_region
    _
  $region17: #{tpu_custom_call.1} parent=0 // pred_fallthru
    _
  // Predicated region
  $region18: #{tpu_custom_call.1} parent=0 // pred_check
    _
  $region19: #{tpu_custom_call.1} parent=0 // pred_check_branch
    %30 = sbr.rel (0) target = $region21
  $region20: #{tpu_custom_call.1} parent=0 // pred_region
    _
  $region21: #{tpu_custom_call.1} parent=0 // pred_fallthru
    _
  // Predicated region
  $region22: #{tpu_custom_call.1} parent=0 // pred_check
    _
  $region23: #{tpu_custom_call.1} parent=0 // pred_check_branch
    %32 = sbr.rel (0) target = $region25
  $region24: #{tpu_custom_call.1} parent=0 // pred_region
    _
  $region25: #{tpu_custom_call.1} parent=0 // pred_fallthru
    _
  // Predicated region
  $region26: #{tpu_custom_call.1} parent=0 // pred_check
    _
  $region27: #{tpu_custom_call.1} parent=0 // pred_check_branch
    %34 = sbr.rel (0) target = $region29
  $region28: #{tpu_custom_call.1} parent=0 // pred_region
    _
  $region29: #{tpu_custom_call.1} parent=0 // pred_fallthru
    _
  // Predicated region
  $region30: #{tpu_custom_call.1} parent=0 // pred_check
    _
  $region31: #{tpu_custom_call.1} parent=0 // pred_check_branch
    %36 = sbr.rel (0) target = $region33
  $region32: #{tpu_custom_call.1} parent=0 // pred_region
    _
  $region33: #{tpu_custom_call.1} parent=0 // pred_fallthru
    _
  // Predicated region
  $region34: #{tpu_custom_call.1} parent=0 // pred_check
    _
  $region35: #{tpu_custom_call.1} parent=0 // pred_check_branch
    %38 = sbr.rel (0) target = $region37
  $region36: #{tpu_custom_call.1} parent=0 // pred_region
    _
  $region37: #{tpu_custom_call.1} parent=0 // pred_fallthru
    _
  // Predicated region
  $region38: #{tpu_custom_call.1} parent=0 // pred_check
    _
  $region39: #{tpu_custom_call.1} parent=0 // pred_check_branch
    %40 = sbr.rel (0) target = $region41
  $region40: #{tpu_custom_call.1} parent=0 // pred_region
    _
  $region41: #{tpu_custom_call.1} parent=0 // pred_fallthru
    _
  // Predicated region
  $region42: #{tpu_custom_call.1} parent=0 // pred_check
    _
  $region43: #{tpu_custom_call.1} parent=0 // pred_check_branch
    %42 = sbr.rel (0) target = $region45
  $region44: #{tpu_custom_call.1} parent=0 // pred_region
    _
  $region45: #{tpu_custom_call.1} parent=0 // pred_fallthru
    _
  // Predicated region
  $region46: #{tpu_custom_call.1} parent=0 // pred_check
    _
  $region47: #{tpu_custom_call.1} parent=0 // pred_check_branch
    %44 = sbr.rel (0) target = $region49
  $region48: #{tpu_custom_call.1} parent=0 // pred_region
    _
  $region49: #{tpu_custom_call.1} parent=0 // pred_fallthru
    _
  // Predicated region
  $region50: #{tpu_custom_call.1} parent=0 // pred_check
    _
  $region51: #{tpu_custom_call.1} parent=0 // pred_check_branch
    %46 = sbr.rel (0) target = $region53
  $region52: #{tpu_custom_call.1} parent=0 // pred_region
    _
  $region53: #{tpu_custom_call.1} parent=0 // pred_fallthru
    _
  // Predicated region
  $region54: #{tpu_custom_call.1} parent=0 // pred_check
    _
  $region55: #{tpu_custom_call.1} parent=0 // pred_check_branch
    %48 = sbr.rel (0) target = $region57
  $region56: #{tpu_custom_call.1} parent=0 // pred_region
    _
  $region57: #{tpu_custom_call.1} parent=0 // pred_fallthru
    _
  %v49 = vld [vmem:[%s0] sm:$0xff]
  %v50 = vld [vmem:[%s0 + $0x8] sm:$0xff]
  %v51 = vld [vmem:[%s0 + $0x10] sm:$0xff]
  %v52 = vld [vmem:[%s0 + $0x18] sm:$0xff]
  %v53 = vld [vmem:[%s0 + $0x20] sm:$0xff]
  %v54 = vld [vmem:[%s0 + $0x28] sm:$0xff]
  %v55 = vld [vmem:[%s0 + $0x30] sm:$0xff]
  %v56 = vld [vmem:[%s0 + $0x38] sm:$0xff]
  %v57 = vld [vmem:[%s0 + $0x40] sm:$0xff]
  %v58 = vld [vmem:[%s0 + $0x48] sm:$0xff]
  %v59 = vld [vmem:[%s0 + $0x50] sm:$0xff]
  %v60 = vld [vmem:[%s0 + $0x58] sm:$0xff]
  %v61 = vld [vmem:[%s0 + $0x60] sm:$0xff]
  %v62 = vld [vmem:[%s0 + $0x68] sm:$0xff]
  %v63 = vld [vmem:[%s0 + $0x70] sm:$0xff]
  %v64 = vld [vmem:[%s0 + $0x78] sm:$0xff]
  %v65 = vld [vmem:[%s0 + $0x80] sm:$0xff]
  %v66 = vld [vmem:[%s0 + $0x88] sm:$0xff]
  %v67 = vld [vmem:[%s0 + $0x90] sm:$0xff]
  %v68 = vld [vmem:[%s0 + $0x98] sm:$0xff]
  %v69 = vld [vmem:[%s0 + $0xa0] sm:$0xff]
  %v70 = vld [vmem:[%s0 + $0xa8] sm:$0xff]
  %v71 = vld [vmem:[%s0 + $0xb0] sm:$0xff]
  %v72 = vld [vmem:[%s0 + $0xb8] sm:$0xff]
  %v73 = vld [vmem:[%s0 + $0xc0] sm:$0xff]
  %v74 = vld [vmem:[%s0 + $0xc8] sm:$0xff]
  %v75 = vld [vmem:[%s0 + $0xd0] sm:$0xff]
  %v76 = vld [vmem:[%s0 + $0xd8] sm:$0xff]
  %v77 = vld [vmem:[%s0 + $0xe0] sm:$0xff]
  %v78 = vld [vmem:[%s0 + $0xe8] sm:$0xff]
  %v79 = vld [vmem:[%s0 + $0xf0] sm:$0xff]
  %v80 = vld [vmem:[%s0 + $0xf8] sm:$0xff]
  %v81 = vld [vmem:[%s3] sm:$0x3f]
  %v82 = vld [vmem:[%s1] sm:$0xff]
  %v83 = vld [vmem:[%s1 + $0x8] sm:$0xff]
  %v84 = vld [vmem:[%s1 + $0x10] sm:$0xff]
  %v85 = vld [vmem:[%s1 + $0x18] sm:$0xff]
  %v86 = vld [vmem:[%s1 + $0x20] sm:$0xff]
  %v87 = vld [vmem:[%s1 + $0x28] sm:$0xff]
  %v88 = vld [vmem:[%s1 + $0x30] sm:$0xff]
  %v89 = vld [vmem:[%s1 + $0x38] sm:$0xff]
  %v90 = vld [vmem:[%s1 + $0x40] sm:$0xff]
  %v91 = vld [vmem:[%s1 + $0x48] sm:$0xff]
  %v92 = vld [vmem:[%s1 + $0x50] sm:$0xff]
  %v93 = vld [vmem:[%s1 + $0x58] sm:$0xff]
  %v94 = vld [vmem:[%s1 + $0x60] sm:$0xff]
  %v95 = vld [vmem:[%s1 + $0x68] sm:$0xff]
  %v96 = vld [vmem:[%s1 + $0x70] sm:$0xff]
  %v97 = vld [vmem:[%s1 + $0x78] sm:$0xff]
  %v98 = vld [vmem:[%s1 + $0x80] sm:$0xff]
  %v99 = vld [vmem:[%s1 + $0x88] sm:$0xff]
  %v100 = vld [vmem:[%s1 + $0x90] sm:$0xff]
  %v101 = vld [vmem:[%s1 + $0x98] sm:$0xff]
  %v102 = vld [vmem:[%s1 + $0xa0] sm:$0xff]
  %v103 = vld [vmem:[%s1 + $0xa8] sm:$0xff]
  %v104 = vld [vmem:[%s1 + $0xb0] sm:$0xff]
  %v105 = vld [vmem:[%s1 + $0xb8] sm:$0xff]
  %v106 = vld [vmem:[%s1 + $0xc0] sm:$0xff]
  %v107 = vld [vmem:[%s1 + $0xc8] sm:$0xff]
  %v108 = vld [vmem:[%s1 + $0xd0] sm:$0xff]
  %v109 = vld [vmem:[%s1 + $0xd8] sm:$0xff]
  %v110 = vld [vmem:[%s1 + $0xe0] sm:$0xff]
  %v111 = vld [vmem:[%s1 + $0xe8] sm:$0xff]
  %v112 = vld [vmem:[%s1 + $0xf0] sm:$0xff]
  %v113 = vld [vmem:[%s1 + $0xf8] sm:$0xff]
  %v114 = vld [vmem:[%s4] sm:$0x3f]
  %vm115 = vcmask 48128
  %v117 = vsel %vm115, %v82, 0
  %v120 = vsel %vm115, %v83, 0
  %v123 = vsel %vm115, %v84, 0
  %v126 = vsel %vm115, %v85, 0
  %v129 = vsel %vm115, %v86, 0
  %v132 = vsel %vm115, %v87, 0
  %v135 = vsel %vm115, %v88, 0
  %v138 = vsel %vm115, %v89, 0
  %v141 = vsel %vm115, %v90, 0
  %v144 = vsel %vm115, %v91, 0
  %v147 = vsel %vm115, %v92, 0
  %v150 = vsel %vm115, %v93, 0
  %v153 = vsel %vm115, %v94, 0
  %v156 = vsel %vm115, %v95, 0
  %v159 = vsel %vm115, %v96, 0
  %v162 = vsel %vm115, %v97, 0
  %v165 = vsel %vm115, %v98, 0
  %v168 = vsel %vm115, %v99, 0
  %v171 = vsel %vm115, %v100, 0
  %v174 = vsel %vm115, %v101, 0
  %v177 = vsel %vm115, %v102, 0
  %v180 = vsel %vm115, %v103, 0
  %v183 = vsel %vm115, %v104, 0
  %v186 = vsel %vm115, %v105, 0
  %v189 = vsel %vm115, %v106, 0
  %v192 = vsel %vm115, %v107, 0
  %v195 = vsel %vm115, %v108, 0
  %v198 = vsel %vm115, %v109, 0
  %v201 = vsel %vm115, %v110, 0
  %v204 = vsel %vm115, %v111, 0
  %v207 = vsel %vm115, %v112, 0
  %v210 = vsel %vm115, %v113, 0
  %vm212 = vcmask 1045504
  %v214 = vsel %vm212, %v114, 0
  %216 = vmatprep.subr.mxu0 0.0
  %217 = vmatpush1.msra.mxu0 %v214
  %218 = vmatprep.subr.mxu0 0.0
  %219 = vmatpush1.msra.mxu0 0.0
  %220 = vmatprep.subr.mxu0 0.0
  %221 = vmatpush1.msra.mxu0 0.0
  %222 = vmatprep.subr.mxu0 0.0
  %223 = vmatpush1.msra.mxu0 0.0
  %224 = vmatprep.subr.mxu0 0.0
  %225 = vmatpush1.msra.mxu0 0.0
  %226 = vmatprep.subr.mxu0 0.0
  %227 = vmatpush1.msra.mxu0 0.0
  %228 = vmatprep.subr.mxu0 0.0
  %229 = vmatpush1.msra.mxu0 0.0
  %230 = vmatprep.subr.mxu0 0.0
  %231 = vmatpush1.msra.mxu0 0.0
  %232 = vmatprep.subr.mxu0 0.0
  %233 = vmatpush1.msra.mxu0 0.0
  %234 = vmatprep.subr.mxu0 0.0
  %235 = vmatpush1.msra.mxu0 0.0
  %236 = vmatprep.subr.mxu0 0.0
  %237 = vmatpush1.msra.mxu0 0.0
  %238 = vmatprep.subr.mxu0 0.0
  %239 = vmatpush1.msra.mxu0 0.0
  %240 = vmatprep.subr.mxu0 0.0
  %241 = vmatpush1.msra.mxu0 0.0
  %242 = vmatprep.subr.mxu0 0.0
  %243 = vmatpush1.msra.mxu0 0.0
  %244 = vmatprep.subr.mxu0 0.0
  %245 = vmatpush1.msra.mxu0 0.0
  %246 = vmatprep.subr.mxu0 0.0
  %247 = vmatpush1.msra.mxu0 0.0
  %248 = vmatprep.subr.mxu0 0.0
  %249 = vmatpush1.msra.mxu0 0.0
  %250 = vmatprep.subr.mxu0 0.0
  %251 = vmatpush1.msra.mxu0 0.0
  %252 = vmatprep.subr.mxu0 0.0
  %253 = vmatpush1.msra.mxu0 0.0
  %254 = vmatprep.subr.mxu0 0.0
  %255 = vmatpush1.msra.mxu0 0.0
  %256 = vmatprep.subr.mxu0 0.0
  %257 = vmatpush1.msra.mxu0 0.0
  %258 = vmatprep.subr.mxu0 0.0
  %259 = vmatpush1.msra.mxu0 0.0
  %260 = vmatprep.subr.mxu0 0.0
  %261 = vmatpush1.msra.mxu0 0.0
  %262 = vmatprep.subr.mxu0 0.0
  %263 = vmatpush1.msra.mxu0 0.0
  %264 = vmatprep.subr.mxu0 0.0
  %265 = vmatpush1.msra.mxu0 0.0
  %266 = vmatprep.subr.mxu0 0.0
  %267 = vmatpush1.msra.mxu0 0.0
  %268 = vmatprep.subr.mxu0 0.0
  %269 = vmatpush1.msra.mxu0 0.0
  %270 = vmatprep.subr.mxu0 0.0
  %271 = vmatpush1.msra.mxu0 0.0
  %272 = vmatprep.subr.mxu0 0.0
  %273 = vmatpush1.msra.mxu0 0.0
  %274 = vmatprep.subr.mxu0 0.0
  %275 = vmatpush1.msra.mxu0 0.0
  %276 = vmatprep.subr.mxu0 0.0
  %277 = vmatpush1.msra.mxu0 0.0
  %278 = vmatprep.subr.mxu0 0.0
  %279 = vmatpush1.msra.mxu0 0.0
  %280 = vmatprep.mubr.f32.mxu0 0.0
  %281 = vmatmul.mubr.f32.gmra.mrb[0].mxu0 %v117
  %v282 = vpop.f32.mrb[0].mxu0
  %v283 = vadd.f32 0.0, %v282
  %v284 = vpop.f32.mrb[0].mxu0
  %285 = vmatprep.mubr.f32.mxu0 0.0
  %286 = vmatmul.mubr.f32.gmra.mrb[0].mxu0 %v120
  %v287 = vpop.f32.mrb[0].mxu0
  %v288 = vadd.f32 0.0, %v287
  %v289 = vpop.f32.mrb[0].mxu0
  %290 = vmatprep.mubr.f32.mxu0 0.0
  %291 = vmatmul.mubr.f32.gmra.mrb[0].mxu0 %v123
  %v292 = vpop.f32.mrb[0].mxu0
  %v293 = vadd.f32 0.0, %v292
  %v294 = vpop.f32.mrb[0].mxu0
  %295 = vmatprep.mubr.f32.mxu0 0.0
  %296 = vmatmul.mubr.f32.gmra.mrb[0].mxu0 %v126
  %v297 = vpop.f32.mrb[0].mxu0
  %v298 = vadd.f32 0.0, %v297
  %v299 = vpop.f32.mrb[0].mxu0
  %300 = vmatprep.mubr.f32.mxu0 0.0
  %301 = vmatmul.mubr.f32.gmra.mrb[0].mxu0 %v129
  %v302 = vpop.f32.mrb[0].mxu0
  %v303 = vadd.f32 0.0, %v302
  %v304 = vpop.f32.mrb[0].mxu0
  %305 = vmatprep.mubr.f32.mxu0 0.0
  %306 = vmatmul.mubr.f32.gmra.mrb[0].mxu0 %v132
  %v307 = vpop.f32.mrb[0].mxu0
  %v308 = vadd.f32 0.0, %v307
  %v309 = vpop.f32.mrb[0].mxu0
  %310 = vmatprep.mubr.f32.mxu0 0.0
  %311 = vmatmul.mubr.f32.gmra.mrb[0].mxu0 %v135
  %v312 = vpop.f32.mrb[0].mxu0
  %v313 = vadd.f32 0.0, %v312
  %v314 = vpop.f32.mrb[0].mxu0
  %315 = vmatprep.mubr.f32.mxu0 0.0
  %316 = vmatmul.mubr.f32.gmra.mrb[0].mxu0 %v138
  %v317 = vpop.f32.mrb[0].mxu0
  %v318 = vadd.f32 0.0, %v317
  %v319 = vpop.f32.mrb[0].mxu0
  %320 = vmatprep.mubr.f32.mxu0 0.0
  %321 = vmatmul.mubr.f32.gmra.mrb[0].mxu0 %v141
  %v322 = vpop.f32.mrb[0].mxu0
  %v323 = vadd.f32 0.0, %v322
  %v324 = vpop.f32.mrb[0].mxu0
  %325 = vmatprep.mubr.f32.mxu0 0.0
  %326 = vmatmul.mubr.f32.gmra.mrb[0].mxu0 %v144
  %v327 = vpop.f32.mrb[0].mxu0
  %v328 = vadd.f32 0.0, %v327
  %v329 = vpop.f32.mrb[0].mxu0
  %330 = vmatprep.mubr.f32.mxu0 0.0
  %331 = vmatmul.mubr.f32.gmra.mrb[0].mxu0 %v147
  %v332 = vpop.f32.mrb[0].mxu0
  %v333 = vadd.f32 0.0, %v332
  %v334 = vpop.f32.mrb[0].mxu0
  %335 = vmatprep.mubr.f32.mxu0 0.0
  %336 = vmatmul.mubr.f32.gmra.mrb[0].mxu0 %v150
  %v337 = vpop.f32.mrb[0].mxu0
  %v338 = vadd.f32 0.0, %v337
  %v339 = vpop.f32.mrb[0].mxu0
  %340 = vmatprep.mubr.f32.mxu0 0.0
  %341 = vmatmul.mubr.f32.gmra.mrb[0].mxu0 %v153
  %v342 = vpop.f32.mrb[0].mxu0
  %v343 = vadd.f32 0.0, %v342
  %v344 = vpop.f32.mrb[0].mxu0
  %345 = vmatprep.mubr.f32.mxu0 0.0
  %346 = vmatmul.mubr.f32.gmra.mrb[0].mxu0 %v156
  %v347 = vpop.f32.mrb[0].mxu0
  %v348 = vadd.f32 0.0, %v347
  %v349 = vpop.f32.mrb[0].mxu0
  %350 = vmatprep.mubr.f32.mxu0 0.0
  %351 = vmatmul.mubr.f32.gmra.mrb[0].mxu0 %v159
  %v352 = vpop.f32.mrb[0].mxu0
  %v353 = vadd.f32 0.0, %v352
  %v354 = vpop.f32.mrb[0].mxu0
  %355 = vmatprep.mubr.f32.mxu0 0.0
  %356 = vmatmul.mubr.f32.gmra.mrb[0].mxu0 %v162
  %v357 = vpop.f32.mrb[0].mxu0
  %v358 = vadd.f32 0.0, %v357
  %v359 = vpop.f32.mrb[0].mxu0
  %360 = vmatprep.mubr.f32.mxu0 0.0
  %361 = vmatmul.mubr.f32.gmra.mrb[0].mxu0 %v165
  %v362 = vpop.f32.mrb[0].mxu0
  %v363 = vadd.f32 0.0, %v362
  %v364 = vpop.f32.mrb[0].mxu0
  %365 = vmatprep.mubr.f32.mxu0 0.0
  %366 = vmatmul.mubr.f32.gmra.mrb[0].mxu0 %v168
  %v367 = vpop.f32.mrb[0].mxu0
  %v368 = vadd.f32 0.0, %v367
  %v369 = vpop.f32.mrb[0].mxu0
  %370 = vmatprep.mubr.f32.mxu0 0.0
  %371 = vmatmul.mubr.f32.gmra.mrb[0].mxu0 %v171
  %v372 = vpop.f32.mrb[0].mxu0
  %v373 = vadd.f32 0.0, %v372
  %v374 = vpop.f32.mrb[0].mxu0
  %375 = vmatprep.mubr.f32.mxu0 0.0
  %376 = vmatmul.mubr.f32.gmra.mrb[0].mxu0 %v174
  %v377 = vpop.f32.mrb[0].mxu0
  %v378 = vadd.f32 0.0, %v377
  %v379 = vpop.f32.mrb[0].mxu0
  %380 = vmatprep.mubr.f32.mxu0 0.0
  %381 = vmatmul.mubr.f32.gmra.mrb[0].mxu0 %v177
  %v382 = vpop.f32.mrb[0].mxu0
  %v383 = vadd.f32 0.0, %v382
  %v384 = vpop.f32.mrb[0].mxu0
  %385 = vmatprep.mubr.f32.mxu0 0.0
  %386 = vmatmul.mubr.f32.gmra.mrb[0].mxu0 %v180
  %v387 = vpop.f32.mrb[0].mxu0
  %v388 = vadd.f32 0.0, %v387
  %v389 = vpop.f32.mrb[0].mxu0
  %390 = vmatprep.mubr.f32.mxu0 0.0
  %391 = vmatmul.mubr.f32.gmra.mrb[0].mxu0 %v183
  %v392 = vpop.f32.mrb[0].mxu0
  %v393 = vadd.f32 0.0, %v392
  %v394 = vpop.f32.mrb[0].mxu0
  %395 = vmatprep.mubr.f32.mxu0 0.0
  %396 = vmatmul.mubr.f32.gmra.mrb[0].mxu0 %v186
  %v397 = vpop.f32.mrb[0].mxu0
  %v398 = vadd.f32 0.0, %v397
  %v399 = vpop.f32.mrb[0].mxu0
  %400 = vmatprep.mubr.f32.mxu0 0.0
  %401 = vmatmul.mubr.f32.gmra.mrb[0].mxu0 %v189
  %v402 = vpop.f32.mrb[0].mxu0
  %v403 = vadd.f32 0.0, %v402
  %v404 = vpop.f32.mrb[0].mxu0
  %405 = vmatprep.mubr.f32.mxu0 0.0
  %406 = vmatmul.mubr.f32.gmra.mrb[0].mxu0 %v192
  %v407 = vpop.f32.mrb[0].mxu0
  %v408 = vadd.f32 0.0, %v407
  %v409 = vpop.f32.mrb[0].mxu0
  %410 = vmatprep.mubr.f32.mxu0 0.0
  %411 = vmatmul.mubr.f32.gmra.mrb[0].mxu0 %v195
  %v412 = vpop.f32.mrb[0].mxu0
  %v413 = vadd.f32 0.0, %v412
  %v414 = vpop.f32.mrb[0].mxu0
  %415 = vmatprep.mubr.f32.mxu0 0.0
  %416 = vmatmul.mubr.f32.gmra.mrb[0].mxu0 %v198
  %v417 = vpop.f32.mrb[0].mxu0
  %v418 = vadd.f32 0.0, %v417
  %v419 = vpop.f32.mrb[0].mxu0
  %420 = vmatprep.mubr.f32.mxu0 0.0
  %421 = vmatmul.mubr.f32.gmra.mrb[0].mxu0 %v201
  %v422 = vpop.f32.mrb[0].mxu0
  %v423 = vadd.f32 0.0, %v422
  %v424 = vpop.f32.mrb[0].mxu0
  %425 = vmatprep.mubr.f32.mxu0 0.0
  %426 = vmatmul.mubr.f32.gmra.mrb[0].mxu0 %v204
  %v427 = vpop.f32.mrb[0].mxu0
  %v428 = vadd.f32 0.0, %v427
  %v429 = vpop.f32.mrb[0].mxu0
  %430 = vmatprep.mubr.f32.mxu0 0.0
  %431 = vmatmul.mubr.f32.gmra.mrb[0].mxu0 %v207
  %v432 = vpop.f32.mrb[0].mxu0
  %v433 = vadd.f32 0.0, %v432
  %v434 = vpop.f32.mrb[0].mxu0
  %435 = vmatprep.mubr.f32.mxu0 0.0
  %436 = vmatmul.mubr.f32.gmra.mrb[0].mxu0 %v210
  %v437 = vpop.f32.mrb[0].mxu0
  %v438 = vadd.f32 0.0, %v437
  %v439 = vpop.f32.mrb[0].mxu0
  %440 = vdwg.mxu0
  %v442 = vsel %vm115, %v49, 0
  %v445 = vsel %vm115, %v50, 0
  %v448 = vsel %vm115, %v51, 0
  %v451 = vsel %vm115, %v52, 0
  %v454 = vsel %vm115, %v53, 0
  %v457 = vsel %vm115, %v54, 0
  %v460 = vsel %vm115, %v55, 0
  %v463 = vsel %vm115, %v56, 0
  %v466 = vsel %vm115, %v57, 0
  %v469 = vsel %vm115, %v58, 0
  %v472 = vsel %vm115, %v59, 0
  %v475 = vsel %vm115, %v60, 0
  %v478 = vsel %vm115, %v61, 0
  %v481 = vsel %vm115, %v62, 0
  %v484 = vsel %vm115, %v63, 0
  %v487 = vsel %vm115, %v64, 0
  %v490 = vsel %vm115, %v65, 0
  %v493 = vsel %vm115, %v66, 0
  %v496 = vsel %vm115, %v67, 0
  %v499 = vsel %vm115, %v68, 0
  %v502 = vsel %vm115, %v69, 0
  %v505 = vsel %vm115, %v70, 0
  %v508 = vsel %vm115, %v71, 0
  %v511 = vsel %vm115, %v72, 0
  %v514 = vsel %vm115, %v73, 0
  %v517 = vsel %vm115, %v74, 0
  %v520 = vsel %vm115, %v75, 0
  %v523 = vsel %vm115, %v76, 0
  %v526 = vsel %vm115, %v77, 0
  %v529 = vsel %vm115, %v78, 0
  %v532 = vsel %vm115, %v79, 0
  %v535 = vsel %vm115, %v80, 0
  %v538 = vsel %vm212, %v81, 0
  %540 = vmatprep.subr.mxu0 0.0
  %541 = vmatpush1.msra.mxu0 %v538
  %542 = vmatprep.subr.mxu0 0.0
  %543 = vmatpush1.msra.mxu0 0.0
  %544 = vmatprep.subr.mxu0 0.0
  %545 = vmatpush1.msra.mxu0 0.0
  %546 = vmatprep.subr.mxu0 0.0
  %547 = vmatpush1.msra.mxu0 0.0
  %548 = vmatprep.subr.mxu0 0.0
  %549 = vmatpush1.msra.mxu0 0.0
  %550 = vmatprep.subr.mxu0 0.0
  %551 = vmatpush1.msra.mxu0 0.0
  %552 = vmatprep.subr.mxu0 0.0
  %553 = vmatpush1.msra.mxu0 0.0
  %554 = vmatprep.subr.mxu0 0.0
  %555 = vmatpush1.msra.mxu0 0.0
  %556 = vmatprep.subr.mxu0 0.0
  %557 = vmatpush1.msra.mxu0 0.0
  %558 = vmatprep.subr.mxu0 0.0
  %559 = vmatpush1.msra.mxu0 0.0
  %560 = vmatprep.subr.mxu0 0.0
  %561 = vmatpush1.msra.mxu0 0.0
  %562 = vmatprep.subr.mxu0 0.0
  %563 = vmatpush1.msra.mxu0 0.0
  %564 = vmatprep.subr.mxu0 0.0
  %565 = vmatpush1.msra.mxu0 0.0
  %566 = vmatprep.subr.mxu0 0.0
  %567 = vmatpush1.msra.mxu0 0.0
  %568 = vmatprep.subr.mxu0 0.0
  %569 = vmatpush1.msra.mxu0 0.0
  %570 = vmatprep.subr.mxu0 0.0
  %571 = vmatpush1.msra.mxu0 0.0
  %572 = vmatprep.subr.mxu0 0.0
  %573 = vmatpush1.msra.mxu0 0.0
  %574 = vmatprep.subr.mxu0 0.0
  %575 = vmatpush1.msra.mxu0 0.0
  %576 = vmatprep.subr.mxu0 0.0
  %577 = vmatpush1.msra.mxu0 0.0
  %578 = vmatprep.subr.mxu0 0.0
  %579 = vmatpush1.msra.mxu0 0.0
  %580 = vmatprep.subr.mxu0 0.0
  %581 = vmatpush1.msra.mxu0 0.0
  %582 = vmatprep.subr.mxu0 0.0
  %583 = vmatpush1.msra.mxu0 0.0
  %584 = vmatprep.subr.mxu0 0.0
  %585 = vmatpush1.msra.mxu0 0.0
  %586 = vmatprep.subr.mxu0 0.0
  %587 = vmatpush1.msra.mxu0 0.0
  %588 = vmatprep.subr.mxu0 0.0
  %589 = vmatpush1.msra.mxu0 0.0
  %590 = vmatprep.subr.mxu0 0.0
  %591 = vmatpush1.msra.mxu0 0.0
  %592 = vmatprep.subr.mxu0 0.0
  %593 = vmatpush1.msra.mxu0 0.0
  %594 = vmatprep.subr.mxu0 0.0
  %595 = vmatpush1.msra.mxu0 0.0
  %596 = vmatprep.subr.mxu0 0.0
  %597 = vmatpush1.msra.mxu0 0.0
  %598 = vmatprep.subr.mxu0 0.0
  %599 = vmatpush1.msra.mxu0 0.0
  %600 = vmatprep.subr.mxu0 0.0
  %601 = vmatpush1.msra.mxu0 0.0
  %602 = vmatprep.subr.mxu0 0.0
  %603 = vmatpush1.msra.mxu0 0.0
  %604 = vmatprep.mubr.f32.mxu0 0.0
  %605 = vmatmul.mubr.f32.gmra.mrb[0].mxu0 %v442
  %v606 = vpop.f32.mrb[0].mxu0
  %v607 = vadd.f32 %v283, %v606
  %v608 = vpop.f32.mrb[0].mxu0
  %609 = vmatprep.mubr.f32.mxu0 0.0
  %610 = vmatmul.mubr.f32.gmra.mrb[0].mxu0 %v445
  %v611 = vpop.f32.mrb[0].mxu0
  %v612 = vadd.f32 %v288, %v611
  %v613 = vpop.f32.mrb[0].mxu0
  %614 = vmatprep.mubr.f32.mxu0 0.0
  %615 = vmatmul.mubr.f32.gmra.mrb[0].mxu0 %v448
  %v616 = vpop.f32.mrb[0].mxu0
  %v617 = vadd.f32 %v293, %v616
  %v618 = vpop.f32.mrb[0].mxu0
  %619 = vmatprep.mubr.f32.mxu0 0.0
  %620 = vmatmul.mubr.f32.gmra.mrb[0].mxu0 %v451
  %v621 = vpop.f32.mrb[0].mxu0
  %v622 = vadd.f32 %v298, %v621
  %v623 = vpop.f32.mrb[0].mxu0
  %624 = vmatprep.mubr.f32.mxu0 0.0
  %625 = vmatmul.mubr.f32.gmra.mrb[0].mxu0 %v454
  %v626 = vpop.f32.mrb[0].mxu0
  %v627 = vadd.f32 %v303, %v626
  %v628 = vpop.f32.mrb[0].mxu0
  %629 = vmatprep.mubr.f32.mxu0 0.0
  %630 = vmatmul.mubr.f32.gmra.mrb[0].mxu0 %v457
  %v631 = vpop.f32.mrb[0].mxu0
  %v632 = vadd.f32 %v308, %v631
  %v633 = vpop.f32.mrb[0].mxu0
  %634 = vmatprep.mubr.f32.mxu0 0.0
  %635 = vmatmul.mubr.f32.gmra.mrb[0].mxu0 %v460
  %v636 = vpop.f32.mrb[0].mxu0
  %v637 = vadd.f32 %v313, %v636
  %v638 = vpop.f32.mrb[0].mxu0
  %639 = vmatprep.mubr.f32.mxu0 0.0
  %640 = vmatmul.mubr.f32.gmra.mrb[0].mxu0 %v463
  %v641 = vpop.f32.mrb[0].mxu0
  %v642 = vadd.f32 %v318, %v641
  %v643 = vpop.f32.mrb[0].mxu0
  %644 = vmatprep.mubr.f32.mxu0 0.0
  %645 = vmatmul.mubr.f32.gmra.mrb[0].mxu0 %v466
  %v646 = vpop.f32.mrb[0].mxu0
  %v647 = vadd.f32 %v323, %v646
  %v648 = vpop.f32.mrb[0].mxu0
  %649 = vmatprep.mubr.f32.mxu0 0.0
  %650 = vmatmul.mubr.f32.gmra.mrb[0].mxu0 %v469
  %v651 = vpop.f32.mrb[0].mxu0
  %v652 = vadd.f32 %v328, %v651
  %v653 = vpop.f32.mrb[0].mxu0
  %654 = vmatprep.mubr.f32.mxu0 0.0
  %655 = vmatmul.mubr.f32.gmra.mrb[0].mxu0 %v472
  %v656 = vpop.f32.mrb[0].mxu0
  %v657 = vadd.f32 %v333, %v656
  %v658 = vpop.f32.mrb[0].mxu0
  %659 = vmatprep.mubr.f32.mxu0 0.0
  %660 = vmatmul.mubr.f32.gmra.mrb[0].mxu0 %v475
  %v661 = vpop.f32.mrb[0].mxu0
  %v662 = vadd.f32 %v338, %v661
  %v663 = vpop.f32.mrb[0].mxu0
  %664 = vmatprep.mubr.f32.mxu0 0.0
  %665 = vmatmul.mubr.f32.gmra.mrb[0].mxu0 %v478
  %v666 = vpop.f32.mrb[0].mxu0
  %v667 = vadd.f32 %v343, %v666
  %v668 = vpop.f32.mrb[0].mxu0
  %669 = vmatprep.mubr.f32.mxu0 0.0
  %670 = vmatmul.mubr.f32.gmra.mrb[0].mxu0 %v481
  %v671 = vpop.f32.mrb[0].mxu0
  %v672 = vadd.f32 %v348, %v671
  %v673 = vpop.f32.mrb[0].mxu0
  %674 = vmatprep.mubr.f32.mxu0 0.0
  %675 = vmatmul.mubr.f32.gmra.mrb[0].mxu0 %v484
  %v676 = vpop.f32.mrb[0].mxu0
  %v677 = vadd.f32 %v353, %v676
  %v678 = vpop.f32.mrb[0].mxu0
  %679 = vmatprep.mubr.f32.mxu0 0.0
  %680 = vmatmul.mubr.f32.gmra.mrb[0].mxu0 %v487
  %v681 = vpop.f32.mrb[0].mxu0
  %v682 = vadd.f32 %v358, %v681
  %v683 = vpop.f32.mrb[0].mxu0
  %684 = vmatprep.mubr.f32.mxu0 0.0
  %685 = vmatmul.mubr.f32.gmra.mrb[0].mxu0 %v490
  %v686 = vpop.f32.mrb[0].mxu0
  %v687 = vadd.f32 %v363, %v686
  %v688 = vpop.f32.mrb[0].mxu0
  %689 = vmatprep.mubr.f32.mxu0 0.0
  %690 = vmatmul.mubr.f32.gmra.mrb[0].mxu0 %v493
  %v691 = vpop.f32.mrb[0].mxu0
  %v692 = vadd.f32 %v368, %v691
  %v693 = vpop.f32.mrb[0].mxu0
  %694 = vmatprep.mubr.f32.mxu0 0.0
  %695 = vmatmul.mubr.f32.gmra.mrb[0].mxu0 %v496
  %v696 = vpop.f32.mrb[0].mxu0
  %v697 = vadd.f32 %v373, %v696
  %v698 = vpop.f32.mrb[0].mxu0
  %699 = vmatprep.mubr.f32.mxu0 0.0
  %700 = vmatmul.mubr.f32.gmra.mrb[0].mxu0 %v499
  %v701 = vpop.f32.mrb[0].mxu0
  %v702 = vadd.f32 %v378, %v701
  %v703 = vpop.f32.mrb[0].mxu0
  %704 = vmatprep.mubr.f32.mxu0 0.0
  %705 = vmatmul.mubr.f32.gmra.mrb[0].mxu0 %v502
  %v706 = vpop.f32.mrb[0].mxu0
  %v707 = vadd.f32 %v383, %v706
  %v708 = vpop.f32.mrb[0].mxu0
  %709 = vmatprep.mubr.f32.mxu0 0.0
  %710 = vmatmul.mubr.f32.gmra.mrb[0].mxu0 %v505
  %v711 = vpop.f32.mrb[0].mxu0
  %v712 = vadd.f32 %v388, %v711
  %v713 = vpop.f32.mrb[0].mxu0
  %714 = vmatprep.mubr.f32.mxu0 0.0
  %715 = vmatmul.mubr.f32.gmra.mrb[0].mxu0 %v508
  %v716 = vpop.f32.mrb[0].mxu0
  %v717 = vadd.f32 %v393, %v716
  %v718 = vpop.f32.mrb[0].mxu0
  %719 = vmatprep.mubr.f32.mxu0 0.0
  %720 = vmatmul.mubr.f32.gmra.mrb[0].mxu0 %v511
  %v721 = vpop.f32.mrb[0].mxu0
  %v722 = vadd.f32 %v398, %v721
  %v723 = vpop.f32.mrb[0].mxu0
  %724 = vmatprep.mubr.f32.mxu0 0.0
  %725 = vmatmul.mubr.f32.gmra.mrb[0].mxu0 %v514
  %v726 = vpop.f32.mrb[0].mxu0
  %v727 = vadd.f32 %v403, %v726
  %v728 = vpop.f32.mrb[0].mxu0
  %729 = vmatprep.mubr.f32.mxu0 0.0
  %730 = vmatmul.mubr.f32.gmra.mrb[0].mxu0 %v517
  %v731 = vpop.f32.mrb[0].mxu0
  %v732 = vadd.f32 %v408, %v731
  %v733 = vpop.f32.mrb[0].mxu0
  %734 = vmatprep.mubr.f32.mxu0 0.0
  %735 = vmatmul.mubr.f32.gmra.mrb[0].mxu0 %v520
  %v736 = vpop.f32.mrb[0].mxu0
  %v737 = vadd.f32 %v413, %v736
  %v738 = vpop.f32.mrb[0].mxu0
  %739 = vmatprep.mubr.f32.mxu0 0.0
  %740 = vmatmul.mubr.f32.gmra.mrb[0].mxu0 %v523
  %v741 = vpop.f32.mrb[0].mxu0
  %v742 = vadd.f32 %v418, %v741
  %v743 = vpop.f32.mrb[0].mxu0
  %744 = vmatprep.mubr.f32.mxu0 0.0
  %745 = vmatmul.mubr.f32.gmra.mrb[0].mxu0 %v526
  %v746 = vpop.f32.mrb[0].mxu0
  %v747 = vadd.f32 %v423, %v746
  %v748 = vpop.f32.mrb[0].mxu0
  %749 = vmatprep.mubr.f32.mxu0 0.0
  %750 = vmatmul.mubr.f32.gmra.mrb[0].mxu0 %v529
  %v751 = vpop.f32.mrb[0].mxu0
  %v752 = vadd.f32 %v428, %v751
  %v753 = vpop.f32.mrb[0].mxu0
  %754 = vmatprep.mubr.f32.mxu0 0.0
  %755 = vmatmul.mubr.f32.gmra.mrb[0].mxu0 %v532
  %v756 = vpop.f32.mrb[0].mxu0
  %v757 = vadd.f32 %v433, %v756
  %v758 = vpop.f32.mrb[0].mxu0
  %759 = vmatprep.mubr.f32.mxu0 0.0
  %760 = vmatmul.mubr.f32.gmra.mrb[0].mxu0 %v535
  %v761 = vpop.f32.mrb[0].mxu0
  %v762 = vadd.f32 %v438, %v761
  %v763 = vpop.f32.mrb[0].mxu0
  %764 = vdwg.mxu0
  %v765 = vld [vmem:[%s2] sm:$0xff]
  %v766 = vld [vmem:[%s2 + $0x8] sm:$0xff]
  %v767 = vld [vmem:[%s2 + $0x10] sm:$0xff]
  %v768 = vld [vmem:[%s2 + $0x18] sm:$0xff]
  %v769 = vld [vmem:[%s2 + $0x20] sm:$0xff]
  %v770 = vld [vmem:[%s2 + $0x28] sm:$0xff]
  %v771 = vld [vmem:[%s2 + $0x30] sm:$0xff]
  %v772 = vld [vmem:[%s2 + $0x38] sm:$0xff]
  %v773 = vld [vmem:[%s2 + $0x40] sm:$0xff]
  %v774 = vld [vmem:[%s2 + $0x48] sm:$0xff]
  %v775 = vld [vmem:[%s2 + $0x50] sm:$0xff]
  %v776 = vld [vmem:[%s2 + $0x58] sm:$0xff]
  %v777 = vld [vmem:[%s2 + $0x60] sm:$0xff]
  %v778 = vld [vmem:[%s2 + $0x68] sm:$0xff]
  %v779 = vld [vmem:[%s2 + $0x70] sm:$0xff]
  %v780 = vld [vmem:[%s2 + $0x78] sm:$0xff]
  %v781 = vld [vmem:[%s2 + $0x80] sm:$0xff]
  %v782 = vld [vmem:[%s2 + $0x88] sm:$0xff]
  %v783 = vld [vmem:[%s2 + $0x90] sm:$0xff]
  %v784 = vld [vmem:[%s2 + $0x98] sm:$0xff]
  %v785 = vld [vmem:[%s2 + $0xa0] sm:$0xff]
  %v786 = vld [vmem:[%s2 + $0xa8] sm:$0xff]
  %v787 = vld [vmem:[%s2 + $0xb0] sm:$0xff]
  %v788 = vld [vmem:[%s2 + $0xb8] sm:$0xff]
  %v789 = vld [vmem:[%s2 + $0xc0] sm:$0xff]
  %v790 = vld [vmem:[%s2 + $0xc8] sm:$0xff]
  %v791 = vld [vmem:[%s2 + $0xd0] sm:$0xff]
  %v792 = vld [vmem:[%s2 + $0xd8] sm:$0xff]
  %v793 = vld [vmem:[%s2 + $0xe0] sm:$0xff]
  %v794 = vld [vmem:[%s2 + $0xe8] sm:$0xff]
  %v795 = vld [vmem:[%s2 + $0xf0] sm:$0xff]
  %v796 = vld [vmem:[%s2 + $0xf8] sm:$0xff]
  %v797 = vld [vmem:[%s5] sm:$0xf]
  %vm798 = vcmask 31744
  %v800 = vsel %vm798, %v765, 0
  %v803 = vsel %vm798, %v766, 0
  %v806 = vsel %vm798, %v767, 0
  %v809 = vsel %vm798, %v768, 0
  %v812 = vsel %vm798, %v769, 0
  %v815 = vsel %vm798, %v770, 0
  %v818 = vsel %vm798, %v771, 0
  %v821 = vsel %vm798, %v772, 0
  %v824 = vsel %vm798, %v773, 0
  %v827 = vsel %vm798, %v774, 0
  %v830 = vsel %vm798, %v775, 0
  %v833 = vsel %vm798, %v776, 0
  %v836 = vsel %vm798, %v777, 0
  %v839 = vsel %vm798, %v778, 0
  %v842 = vsel %vm798, %v779, 0
  %v845 = vsel %vm798, %v780, 0
  %v848 = vsel %vm798, %v781, 0
  %v851 = vsel %vm798, %v782, 0
  %v854 = vsel %vm798, %v783, 0
  %v857 = vsel %vm798, %v784, 0
  %v860 = vsel %vm798, %v785, 0
  %v863 = vsel %vm798, %v786, 0
  %v866 = vsel %vm798, %v787, 0
  %v869 = vsel %vm798, %v788, 0
  %v872 = vsel %vm798, %v789, 0
  %v875 = vsel %vm798, %v790, 0
  %v878 = vsel %vm798, %v791, 0
  %v881 = vsel %vm798, %v792, 0
  %v884 = vsel %vm798, %v793, 0
  %v887 = vsel %vm798, %v794, 0
  %v890 = vsel %vm798, %v795, 0
  %v893 = vsel %vm798, %v796, 0
  %vm895 = vcmask 1043456
  %v897 = vsel %vm895, %v797, 0
  %899 = vmatprep.subr.mxu0 0.0
  %900 = vmatpush1.msra.mxu0 %v897
  %901 = vmatprep.subr.mxu0 0.0
  %902 = vmatpush1.msra.mxu0 0.0
  %903 = vmatprep.subr.mxu0 0.0
  %904 = vmatpush1.msra.mxu0 0.0
  %905 = vmatprep.subr.mxu0 0.0
  %906 = vmatpush1.msra.mxu0 0.0
  %907 = vmatprep.subr.mxu0 0.0
  %908 = vmatpush1.msra.mxu0 0.0
  %909 = vmatprep.subr.mxu0 0.0
  %910 = vmatpush1.msra.mxu0 0.0
  %911 = vmatprep.subr.mxu0 0.0
  %912 = vmatpush1.msra.mxu0 0.0
  %913 = vmatprep.subr.mxu0 0.0
  %914 = vmatpush1.msra.mxu0 0.0
  %915 = vmatprep.subr.mxu0 0.0
  %916 = vmatpush1.msra.mxu0 0.0
  %917 = vmatprep.subr.mxu0 0.0
  %918 = vmatpush1.msra.mxu0 0.0
  %919 = vmatprep.subr.mxu0 0.0
  %920 = vmatpush1.msra.mxu0 0.0
  %921 = vmatprep.subr.mxu0 0.0
  %922 = vmatpush1.msra.mxu0 0.0
  %923 = vmatprep.subr.mxu0 0.0
  %924 = vmatpush1.msra.mxu0 0.0
  %925 = vmatprep.subr.mxu0 0.0
  %926 = vmatpush1.msra.mxu0 0.0
  %927 = vmatprep.subr.mxu0 0.0
  %928 = vmatpush1.msra.mxu0 0.0
  %929 = vmatprep.subr.mxu0 0.0
  %930 = vmatpush1.msra.mxu0 0.0
  %931 = vmatprep.subr.mxu0 0.0
  %932 = vmatpush1.msra.mxu0 0.0
  %933 = vmatprep.subr.mxu0 0.0
  %934 = vmatpush1.msra.mxu0 0.0
  %935 = vmatprep.subr.mxu0 0.0
  %936 = vmatpush1.msra.mxu0 0.0
  %937 = vmatprep.subr.mxu0 0.0
  %938 = vmatpush1.msra.mxu0 0.0
  %939 = vmatprep.subr.mxu0 0.0
  %940 = vmatpush1.msra.mxu0 0.0
  %941 = vmatprep.subr.mxu0 0.0
  %942 = vmatpush1.msra.mxu0 0.0
  %943 = vmatprep.subr.mxu0 0.0
  %944 = vmatpush1.msra.mxu0 0.0
  %945 = vmatprep.subr.mxu0 0.0
  %946 = vmatpush1.msra.mxu0 0.0
  %947 = vmatprep.subr.mxu0 0.0
  %948 = vmatpush1.msra.mxu0 0.0
  %949 = vmatprep.subr.mxu0 0.0
  %950 = vmatpush1.msra.mxu0 0.0
  %951 = vmatprep.subr.mxu0 0.0
  %952 = vmatpush1.msra.mxu0 0.0
  %953 = vmatprep.subr.mxu0 0.0
  %954 = vmatpush1.msra.mxu0 0.0
  %955 = vmatprep.subr.mxu0 0.0
  %956 = vmatpush1.msra.mxu0 0.0
  %957 = vmatprep.subr.mxu0 0.0
  %958 = vmatpush1.msra.mxu0 0.0
  %959 = vmatprep.subr.mxu0 0.0
  %960 = vmatpush1.msra.mxu0 0.0
  %961 = vmatprep.subr.mxu0 0.0
  %962 = vmatpush1.msra.mxu0 0.0
  %963 = vmatprep.mubr.f32.mxu0 0.0
  %964 = vmatmul.mubr.f32.gmra.mrb[0].mxu0 %v800
  %v965 = vpop.f32.mrb[0].mxu0
  %v966 = vadd.f32 0.0, %v965
  %v967 = vpop.f32.mrb[0].mxu0
  %968 = vmatprep.mubr.f32.mxu0 0.0
  %969 = vmatmul.mubr.f32.gmra.mrb[0].mxu0 %v803
  %v970 = vpop.f32.mrb[0].mxu0
  %v971 = vadd.f32 0.0, %v970
  %v972 = vpop.f32.mrb[0].mxu0
  %973 = vmatprep.mubr.f32.mxu0 0.0
  %974 = vmatmul.mubr.f32.gmra.mrb[0].mxu0 %v806
  %v975 = vpop.f32.mrb[0].mxu0
  %v976 = vadd.f32 0.0, %v975
  %v977 = vpop.f32.mrb[0].mxu0
  %978 = vmatprep.mubr.f32.mxu0 0.0
  %979 = vmatmul.mubr.f32.gmra.mrb[0].mxu0 %v809
  %v980 = vpop.f32.mrb[0].mxu0
  %v981 = vadd.f32 0.0, %v980
  %v982 = vpop.f32.mrb[0].mxu0
  %983 = vmatprep.mubr.f32.mxu0 0.0
  %984 = vmatmul.mubr.f32.gmra.mrb[0].mxu0 %v812
  %v985 = vpop.f32.mrb[0].mxu0
  %v986 = vadd.f32 0.0, %v985
  %v987 = vpop.f32.mrb[0].mxu0
  %988 = vmatprep.mubr.f32.mxu0 0.0
  %989 = vmatmul.mubr.f32.gmra.mrb[0].mxu0 %v815
  %v990 = vpop.f32.mrb[0].mxu0
  %v991 = vadd.f32 0.0, %v990
  %v992 = vpop.f32.mrb[0].mxu0
  %993 = vmatprep.mubr.f32.mxu0 0.0
  %994 = vmatmul.mubr.f32.gmra.mrb[0].mxu0 %v818
  %v995 = vpop.f32.mrb[0].mxu0
  %v996 = vadd.f32 0.0, %v995
  %v997 = vpop.f32.mrb[0].mxu0
  %998 = vmatprep.mubr.f32.mxu0 0.0
  %999 = vmatmul.mubr.f32.gmra.mrb[0].mxu0 %v821
  %v1000 = vpop.f32.mrb[0].mxu0
  %v1001 = vadd.f32 0.0, %v1000
  %v1002 = vpop.f32.mrb[0].mxu0
  %1003 = vmatprep.mubr.f32.mxu0 0.0
  %1004 = vmatmul.mubr.f32.gmra.mrb[0].mxu0 %v824
  %v1005 = vpop.f32.mrb[0].mxu0
  %v1006 = vadd.f32 0.0, %v1005
  %v1007 = vpop.f32.mrb[0].mxu0
  %1008 = vmatprep.mubr.f32.mxu0 0.0
  %1009 = vmatmul.mubr.f32.gmra.mrb[0].mxu0 %v827
  %v1010 = vpop.f32.mrb[0].mxu0
  %v1011 = vadd.f32 0.0, %v1010
  %v1012 = vpop.f32.mrb[0].mxu0
  %1013 = vmatprep.mubr.f32.mxu0 0.0
  %1014 = vmatmul.mubr.f32.gmra.mrb[0].mxu0 %v830
  %v1015 = vpop.f32.mrb[0].mxu0
  %v1016 = vadd.f32 0.0, %v1015
  %v1017 = vpop.f32.mrb[0].mxu0
  %1018 = vmatprep.mubr.f32.mxu0 0.0
  %1019 = vmatmul.mubr.f32.gmra.mrb[0].mxu0 %v833
  %v1020 = vpop.f32.mrb[0].mxu0
  %v1021 = vadd.f32 0.0, %v1020
  %v1022 = vpop.f32.mrb[0].mxu0
  %1023 = vmatprep.mubr.f32.mxu0 0.0
  %1024 = vmatmul.mubr.f32.gmra.mrb[0].mxu0 %v836
  %v1025 = vpop.f32.mrb[0].mxu0
  %v1026 = vadd.f32 0.0, %v1025
  %v1027 = vpop.f32.mrb[0].mxu0
  %1028 = vmatprep.mubr.f32.mxu0 0.0
  %1029 = vmatmul.mubr.f32.gmra.mrb[0].mxu0 %v839
  %v1030 = vpop.f32.mrb[0].mxu0
  %v1031 = vadd.f32 0.0, %v1030
  %v1032 = vpop.f32.mrb[0].mxu0
  %1033 = vmatprep.mubr.f32.mxu0 0.0
  %1034 = vmatmul.mubr.f32.gmra.mrb[0].mxu0 %v842
  %v1035 = vpop.f32.mrb[0].mxu0
  %v1036 = vadd.f32 0.0, %v1035
  %v1037 = vpop.f32.mrb[0].mxu0
  %1038 = vmatprep.mubr.f32.mxu0 0.0
  %1039 = vmatmul.mubr.f32.gmra.mrb[0].mxu0 %v845
  %v1040 = vpop.f32.mrb[0].mxu0
  %v1041 = vadd.f32 0.0, %v1040
  %v1042 = vpop.f32.mrb[0].mxu0
  %1043 = vmatprep.mubr.f32.mxu0 0.0
  %1044 = vmatmul.mubr.f32.gmra.mrb[0].mxu0 %v848
  %v1045 = vpop.f32.mrb[0].mxu0
  %v1046 = vadd.f32 0.0, %v1045
  %v1047 = vpop.f32.mrb[0].mxu0
  %1048 = vmatprep.mubr.f32.mxu0 0.0
  %1049 = vmatmul.mubr.f32.gmra.mrb[0].mxu0 %v851
  %v1050 = vpop.f32.mrb[0].mxu0
  %v1051 = vadd.f32 0.0, %v1050
  %v1052 = vpop.f32.mrb[0].mxu0
  %1053 = vmatprep.mubr.f32.mxu0 0.0
  %1054 = vmatmul.mubr.f32.gmra.mrb[0].mxu0 %v854
  %v1055 = vpop.f32.mrb[0].mxu0
  %v1056 = vadd.f32 0.0, %v1055
  %v1057 = vpop.f32.mrb[0].mxu0
  %1058 = vmatprep.mubr.f32.mxu0 0.0
  %1059 = vmatmul.mubr.f32.gmra.mrb[0].mxu0 %v857
  %v1060 = vpop.f32.mrb[0].mxu0
  %v1061 = vadd.f32 0.0, %v1060
  %v1062 = vpop.f32.mrb[0].mxu0
  %1063 = vmatprep.mubr.f32.mxu0 0.0
  %1064 = vmatmul.mubr.f32.gmra.mrb[0].mxu0 %v860
  %v1065 = vpop.f32.mrb[0].mxu0
  %v1066 = vadd.f32 0.0, %v1065
  %v1067 = vpop.f32.mrb[0].mxu0
  %1068 = vmatprep.mubr.f32.mxu0 0.0
  %1069 = vmatmul.mubr.f32.gmra.mrb[0].mxu0 %v863
  %v1070 = vpop.f32.mrb[0].mxu0
  %v1071 = vadd.f32 0.0, %v1070
  %v1072 = vpop.f32.mrb[0].mxu0
  %1073 = vmatprep.mubr.f32.mxu0 0.0
  %1074 = vmatmul.mubr.f32.gmra.mrb[0].mxu0 %v866
  %v1075 = vpop.f32.mrb[0].mxu0
  %v1076 = vadd.f32 0.0, %v1075
  %v1077 = vpop.f32.mrb[0].mxu0
  %1078 = vmatprep.mubr.f32.mxu0 0.0
  %1079 = vmatmul.mubr.f32.gmra.mrb[0].mxu0 %v869
  %v1080 = vpop.f32.mrb[0].mxu0
  %v1081 = vadd.f32 0.0, %v1080
  %v1082 = vpop.f32.mrb[0].mxu0
  %1083 = vmatprep.mubr.f32.mxu0 0.0
  %1084 = vmatmul.mubr.f32.gmra.mrb[0].mxu0 %v872
  %v1085 = vpop.f32.mrb[0].mxu0
  %v1086 = vadd.f32 0.0, %v1085
  %v1087 = vpop.f32.mrb[0].mxu0
  %1088 = vmatprep.mubr.f32.mxu0 0.0
  %1089 = vmatmul.mubr.f32.gmra.mrb[0].mxu0 %v875
  %v1090 = vpop.f32.mrb[0].mxu0
  %v1091 = vadd.f32 0.0, %v1090
  %v1092 = vpop.f32.mrb[0].mxu0
  %1093 = vmatprep.mubr.f32.mxu0 0.0
  %1094 = vmatmul.mubr.f32.gmra.mrb[0].mxu0 %v878
  %v1095 = vpop.f32.mrb[0].mxu0
  %v1096 = vadd.f32 0.0, %v1095
  %v1097 = vpop.f32.mrb[0].mxu0
  %1098 = vmatprep.mubr.f32.mxu0 0.0
  %1099 = vmatmul.mubr.f32.gmra.mrb[0].mxu0 %v881
  %v1100 = vpop.f32.mrb[0].mxu0
  %v1101 = vadd.f32 0.0, %v1100
  %v1102 = vpop.f32.mrb[0].mxu0
  %1103 = vmatprep.mubr.f32.mxu0 0.0
  %1104 = vmatmul.mubr.f32.gmra.mrb[0].mxu0 %v884
  %v1105 = vpop.f32.mrb[0].mxu0
  %v1106 = vadd.f32 0.0, %v1105
  %v1107 = vpop.f32.mrb[0].mxu0
  %1108 = vmatprep.mubr.f32.mxu0 0.0
  %1109 = vmatmul.mubr.f32.gmra.mrb[0].mxu0 %v887
  %v1110 = vpop.f32.mrb[0].mxu0
  %v1111 = vadd.f32 0.0, %v1110
  %v1112 = vpop.f32.mrb[0].mxu0
  %1113 = vmatprep.mubr.f32.mxu0 0.0
  %1114 = vmatmul.mubr.f32.gmra.mrb[0].mxu0 %v890
  %v1115 = vpop.f32.mrb[0].mxu0
  %v1116 = vadd.f32 0.0, %v1115
  %v1117 = vpop.f32.mrb[0].mxu0
  %1118 = vmatprep.mubr.f32.mxu0 0.0
  %1119 = vmatmul.mubr.f32.gmra.mrb[0].mxu0 %v893
  %v1120 = vpop.f32.mrb[0].mxu0
  %v1121 = vadd.f32 0.0, %v1120
  %v1122 = vpop.f32.mrb[0].mxu0
  %1123 = vdwg.mxu0
  %v1124 = vadd.f32 %v607, %v966
  %v1125 = vadd.f32 %v612, %v971
  %v1126 = vadd.f32 %v617, %v976
  %v1127 = vadd.f32 %v622, %v981
  %v1128 = vadd.f32 %v627, %v986
  %v1129 = vadd.f32 %v632, %v991
  %v1130 = vadd.f32 %v637, %v996
  %v1131 = vadd.f32 %v642, %v1001
  %v1132 = vadd.f32 %v647, %v1006
  %v1133 = vadd.f32 %v652, %v1011
  %v1134 = vadd.f32 %v657, %v1016
  %v1135 = vadd.f32 %v662, %v1021
  %v1136 = vadd.f32 %v667, %v1026
  %v1137 = vadd.f32 %v672, %v1031
  %v1138 = vadd.f32 %v677, %v1036
  %v1139 = vadd.f32 %v682, %v1041
  %v1140 = vadd.f32 %v687, %v1046
  %v1141 = vadd.f32 %v692, %v1051
  %v1142 = vadd.f32 %v697, %v1056
  %v1143 = vadd.f32 %v702, %v1061
  %v1144 = vadd.f32 %v707, %v1066
  %v1145 = vadd.f32 %v712, %v1071
  %v1146 = vadd.f32 %v717, %v1076
  %v1147 = vadd.f32 %v722, %v1081
  %v1148 = vadd.f32 %v727, %v1086
  %v1149 = vadd.f32 %v732, %v1091
  %v1150 = vadd.f32 %v737, %v1096
  %v1151 = vadd.f32 %v742, %v1101
  %v1152 = vadd.f32 %v747, %v1106
  %v1153 = vadd.f32 %v752, %v1111
  %v1154 = vadd.f32 %v757, %v1116
  %v1155 = vadd.f32 %v762, %v1121
  %v1156 = vld [vmem:[%s6] sm:$0x1]
  %v1158 = vlaneseq
  %v1159 = vshrl.u32 %v1158, 7
  %v1160 = vsub.s32 0, %v1159
  %v1161 = vrot.slane %v1156, %v1160
  %v1163 = vadd.f32 %v1124, %v1161
  %v1164 = vadd.f32 %v1125, %v1161
  %v1165 = vadd.f32 %v1126, %v1161
  %v1166 = vadd.f32 %v1127, %v1161
  %v1167 = vadd.f32 %v1128, %v1161
  %v1168 = vadd.f32 %v1129, %v1161
  %v1169 = vadd.f32 %v1130, %v1161
  %v1170 = vadd.f32 %v1131, %v1161
  %v1171 = vadd.f32 %v1132, %v1161
  %v1172 = vadd.f32 %v1133, %v1161
  %v1173 = vadd.f32 %v1134, %v1161
  %v1174 = vadd.f32 %v1135, %v1161
  %v1175 = vadd.f32 %v1136, %v1161
  %v1176 = vadd.f32 %v1137, %v1161
  %v1177 = vadd.f32 %v1138, %v1161
  %v1178 = vadd.f32 %v1139, %v1161
  %v1179 = vadd.f32 %v1140, %v1161
  %v1180 = vadd.f32 %v1141, %v1161
  %v1181 = vadd.f32 %v1142, %v1161
  %v1182 = vadd.f32 %v1143, %v1161
  %v1183 = vadd.f32 %v1144, %v1161
  %v1184 = vadd.f32 %v1145, %v1161
  %v1185 = vadd.f32 %v1146, %v1161
  %v1186 = vadd.f32 %v1147, %v1161
  %v1187 = vadd.f32 %v1148, %v1161
  %v1188 = vadd.f32 %v1149, %v1161
  %v1189 = vadd.f32 %v1150, %v1161
  %v1190 = vadd.f32 %v1151, %v1161
  %v1191 = vadd.f32 %v1152, %v1161
  %v1192 = vadd.f32 %v1153, %v1161
  %v1193 = vadd.f32 %v1154, %v1161
  %v1194 = vadd.f32 %v1155, %v1161
  %v1195 = vtanh.pop %v1163
  %v1196 = vtanh.pop %v1164
  %v1197 = vtanh.pop %v1165
  %v1198 = vtanh.pop %v1166
  %v1199 = vtanh.pop %v1167
  %v1200 = vtanh.pop %v1168
  %v1201 = vtanh.pop %v1169
  %v1202 = vtanh.pop %v1170
  %v1203 = vtanh.pop %v1171
  %v1204 = vtanh.pop %v1172
  %v1205 = vtanh.pop %v1173
  %v1206 = vtanh.pop %v1174
  %v1207 = vtanh.pop %v1175
  %v1208 = vtanh.pop %v1176
  %v1209 = vtanh.pop %v1177
  %v1210 = vtanh.pop %v1178
  %v1211 = vtanh.pop %v1179
  %v1212 = vtanh.pop %v1180
  %v1213 = vtanh.pop %v1181
  %v1214 = vtanh.pop %v1182
  %v1215 = vtanh.pop %v1183
  %v1216 = vtanh.pop %v1184
  %v1217 = vtanh.pop %v1185
  %v1218 = vtanh.pop %v1186
  %v1219 = vtanh.pop %v1187
  %v1220 = vtanh.pop %v1188
  %v1221 = vtanh.pop %v1189
  %v1222 = vtanh.pop %v1190
  %v1223 = vtanh.pop %v1191
  %v1224 = vtanh.pop %v1192
  %v1225 = vtanh.pop %v1193
  %v1226 = vtanh.pop %v1194
  %v1227 = vld [vmem:[%s7] sm:$0xff]
  %v1228 = vld [vmem:[%s7 + $0x8] sm:$0xff]
  %v1229 = vld [vmem:[%s7 + $0x10] sm:$0xff]
  %v1230 = vld [vmem:[%s7 + $0x18] sm:$0xff]
  %v1231 = vld [vmem:[%s8] sm:$0x1]
  %v1233 = vlaneseq
  %v1234 = vshrl.u32 %v1233, 7
  %v1235 = vsub.s32 0, %v1234
  %v1236 = vrot.slane %v1231, %v1235
  %vm1238 = vcmask 261120
  %v1240 = vsel %vm1238, %v1195, 0
  %v1243 = vsel %vm1238, %v1196, 0
  %v1246 = vsel %vm1238, %v1197, 0
  %v1249 = vsel %vm1238, %v1198, 0
  %v1252 = vsel %vm1238, %v1199, 0
  %v1255 = vsel %vm1238, %v1200, 0
  %v1258 = vsel %vm1238, %v1201, 0
  %v1261 = vsel %vm1238, %v1202, 0
  %v1264 = vsel %vm1238, %v1203, 0
  %v1267 = vsel %vm1238, %v1204, 0
  %v1270 = vsel %vm1238, %v1205, 0
  %v1273 = vsel %vm1238, %v1206, 0
  %v1276 = vsel %vm1238, %v1207, 0
  %v1279 = vsel %vm1238, %v1208, 0
  %v1282 = vsel %vm1238, %v1209, 0
  %v1285 = vsel %vm1238, %v1210, 0
  %v1288 = vsel %vm1238, %v1211, 0
  %v1291 = vsel %vm1238, %v1212, 0
  %v1294 = vsel %vm1238, %v1213, 0
  %v1297 = vsel %vm1238, %v1214, 0
  %v1300 = vsel %vm1238, %v1215, 0
  %v1303 = vsel %vm1238, %v1216, 0
  %v1306 = vsel %vm1238, %v1217, 0
  %v1309 = vsel %vm1238, %v1218, 0
  %v1312 = vsel %vm1238, %v1219, 0
  %v1315 = vsel %vm1238, %v1220, 0
  %v1318 = vsel %vm1238, %v1221, 0
  %v1321 = vsel %vm1238, %v1222, 0
  %v1324 = vsel %vm1238, %v1223, 0
  %v1327 = vsel %vm1238, %v1224, 0
  %v1330 = vsel %vm1238, %v1225, 0
  %v1333 = vsel %vm1238, %v1226, 0
  %1335 = vmatprep.subr.mxu0 0.0
  %1336 = vmatpush1.msra.mxu0 %v1227
  %1337 = vmatprep.subr.mxu0 0.0
  %1338 = vmatpush1.msra.mxu0 %v1228
  %1339 = vmatprep.subr.mxu0 0.0
  %1340 = vmatpush1.msra.mxu0 %v1229
  %1341 = vmatprep.subr.mxu0 0.0
  %1342 = vmatpush1.msra.mxu0 %v1230
  %1343 = vmatprep.subr.mxu0 0.0
  %1344 = vmatpush1.msra.mxu0 0.0
  %1345 = vmatprep.subr.mxu0 0.0
  %1346 = vmatpush1.msra.mxu0 0.0
  %1347 = vmatprep.subr.mxu0 0.0
  %1348 = vmatpush1.msra.mxu0 0.0
  %1349 = vmatprep.subr.mxu0 0.0
  %1350 = vmatpush1.msra.mxu0 0.0
  %1351 = vmatprep.subr.mxu0 0.0
  %1352 = vmatpush1.msra.mxu0 0.0
  %1353 = vmatprep.subr.mxu0 0.0
  %1354 = vmatpush1.msra.mxu0 0.0
  %1355 = vmatprep.subr.mxu0 0.0
  %1356 = vmatpush1.msra.mxu0 0.0
  %1357 = vmatprep.subr.mxu0 0.0
  %1358 = vmatpush1.msra.mxu0 0.0
  %1359 = vmatprep.subr.mxu0 0.0
  %1360 = vmatpush1.msra.mxu0 0.0
  %1361 = vmatprep.subr.mxu0 0.0
  %1362 = vmatpush1.msra.mxu0 0.0
  %1363 = vmatprep.subr.mxu0 0.0
  %1364 = vmatpush1.msra.mxu0 0.0
  %1365 = vmatprep.subr.mxu0 0.0
  %1366 = vmatpush1.msra.mxu0 0.0
  %1367 = vmatprep.subr.mxu0 0.0
  %1368 = vmatpush1.msra.mxu0 0.0
  %1369 = vmatprep.subr.mxu0 0.0
  %1370 = vmatpush1.msra.mxu0 0.0
  %1371 = vmatprep.subr.mxu0 0.0
  %1372 = vmatpush1.msra.mxu0 0.0
  %1373 = vmatprep.subr.mxu0 0.0
  %1374 = vmatpush1.msra.mxu0 0.0
  %1375 = vmatprep.subr.mxu0 0.0
  %1376 = vmatpush1.msra.mxu0 0.0
  %1377 = vmatprep.subr.mxu0 0.0
  %1378 = vmatpush1.msra.mxu0 0.0
  %1379 = vmatprep.subr.mxu0 0.0
  %1380 = vmatpush1.msra.mxu0 0.0
  %1381 = vmatprep.subr.mxu0 0.0
  %1382 = vmatpush1.msra.mxu0 0.0
  %1383 = vmatprep.subr.mxu0 0.0
  %1384 = vmatpush1.msra.mxu0 0.0
  %1385 = vmatprep.subr.mxu0 0.0
  %1386 = vmatpush1.msra.mxu0 0.0
  %1387 = vmatprep.subr.mxu0 0.0
  %1388 = vmatpush1.msra.mxu0 0.0
  %1389 = vmatprep.subr.mxu0 0.0
  %1390 = vmatpush1.msra.mxu0 0.0
  %1391 = vmatprep.subr.mxu0 0.0
  %1392 = vmatpush1.msra.mxu0 0.0
  %1393 = vmatprep.subr.mxu0 0.0
  %1394 = vmatpush1.msra.mxu0 0.0
  %1395 = vmatprep.subr.mxu0 0.0
  %1396 = vmatpush1.msra.mxu0 0.0
  %1397 = vmatprep.subr.mxu0 0.0
  %1398 = vmatpush1.msra.mxu0 0.0
  %1399 = vmatprep.mubr.f32.mxu0 0.0
  %1400 = vmatmul.mubr.f32.gmra.mrb[0].mxu0 %v1240
  %v1401 = vpop.f32.mrb[0].mxu0
  %v1402 = vadd.f32 %v1236, %v1401
  %v1403 = vpop.f32.mrb[0].mxu0
  %1404 = vmatprep.mubr.f32.mxu0 0.0
  %1405 = vmatmul.mubr.f32.gmra.mrb[0].mxu0 %v1243
  %v1406 = vpop.f32.mrb[0].mxu0
  %v1407 = vadd.f32 %v1236, %v1406
  %v1408 = vpop.f32.mrb[0].mxu0
  %1409 = vmatprep.mubr.f32.mxu0 0.0
  %1410 = vmatmul.mubr.f32.gmra.mrb[0].mxu0 %v1246
  %v1411 = vpop.f32.mrb[0].mxu0
  %v1412 = vadd.f32 %v1236, %v1411
  %v1413 = vpop.f32.mrb[0].mxu0
  %1414 = vmatprep.mubr.f32.mxu0 0.0
  %1415 = vmatmul.mubr.f32.gmra.mrb[0].mxu0 %v1249
  %v1416 = vpop.f32.mrb[0].mxu0
  %v1417 = vadd.f32 %v1236, %v1416
  %v1418 = vpop.f32.mrb[0].mxu0
  %1419 = vmatprep.mubr.f32.mxu0 0.0
  %1420 = vmatmul.mubr.f32.gmra.mrb[0].mxu0 %v1252
  %v1421 = vpop.f32.mrb[0].mxu0
  %v1422 = vadd.f32 %v1236, %v1421
  %v1423 = vpop.f32.mrb[0].mxu0
  %1424 = vmatprep.mubr.f32.mxu0 0.0
  %1425 = vmatmul.mubr.f32.gmra.mrb[0].mxu0 %v1255
  %v1426 = vpop.f32.mrb[0].mxu0
  %v1427 = vadd.f32 %v1236, %v1426
  %v1428 = vpop.f32.mrb[0].mxu0
  %1429 = vmatprep.mubr.f32.mxu0 0.0
  %1430 = vmatmul.mubr.f32.gmra.mrb[0].mxu0 %v1258
  %v1431 = vpop.f32.mrb[0].mxu0
  %v1432 = vadd.f32 %v1236, %v1431
  %v1433 = vpop.f32.mrb[0].mxu0
  %1434 = vmatprep.mubr.f32.mxu0 0.0
  %1435 = vmatmul.mubr.f32.gmra.mrb[0].mxu0 %v1261
  %v1436 = vpop.f32.mrb[0].mxu0
  %v1437 = vadd.f32 %v1236, %v1436
  %v1438 = vpop.f32.mrb[0].mxu0
  %1439 = vmatprep.mubr.f32.mxu0 0.0
  %1440 = vmatmul.mubr.f32.gmra.mrb[0].mxu0 %v1264
  %v1441 = vpop.f32.mrb[0].mxu0
  %v1442 = vadd.f32 %v1236, %v1441
  %v1443 = vpop.f32.mrb[0].mxu0
  %1444 = vmatprep.mubr.f32.mxu0 0.0
  %1445 = vmatmul.mubr.f32.gmra.mrb[0].mxu0 %v1267
  %v1446 = vpop.f32.mrb[0].mxu0
  %v1447 = vadd.f32 %v1236, %v1446
  %v1448 = vpop.f32.mrb[0].mxu0
  %1449 = vmatprep.mubr.f32.mxu0 0.0
  %1450 = vmatmul.mubr.f32.gmra.mrb[0].mxu0 %v1270
  %v1451 = vpop.f32.mrb[0].mxu0
  %v1452 = vadd.f32 %v1236, %v1451
  %v1453 = vpop.f32.mrb[0].mxu0
  %1454 = vmatprep.mubr.f32.mxu0 0.0
  %1455 = vmatmul.mubr.f32.gmra.mrb[0].mxu0 %v1273
  %v1456 = vpop.f32.mrb[0].mxu0
  %v1457 = vadd.f32 %v1236, %v1456
  %v1458 = vpop.f32.mrb[0].mxu0
  %1459 = vmatprep.mubr.f32.mxu0 0.0
  %1460 = vmatmul.mubr.f32.gmra.mrb[0].mxu0 %v1276
  %v1461 = vpop.f32.mrb[0].mxu0
  %v1462 = vadd.f32 %v1236, %v1461
  %v1463 = vpop.f32.mrb[0].mxu0
  %1464 = vmatprep.mubr.f32.mxu0 0.0
  %1465 = vmatmul.mubr.f32.gmra.mrb[0].mxu0 %v1279
  %v1466 = vpop.f32.mrb[0].mxu0
  %v1467 = vadd.f32 %v1236, %v1466
  %v1468 = vpop.f32.mrb[0].mxu0
  %1469 = vmatprep.mubr.f32.mxu0 0.0
  %1470 = vmatmul.mubr.f32.gmra.mrb[0].mxu0 %v1282
  %v1471 = vpop.f32.mrb[0].mxu0
  %v1472 = vadd.f32 %v1236, %v1471
  %v1473 = vpop.f32.mrb[0].mxu0
  %1474 = vmatprep.mubr.f32.mxu0 0.0
  %1475 = vmatmul.mubr.f32.gmra.mrb[0].mxu0 %v1285
  %v1476 = vpop.f32.mrb[0].mxu0
  %v1477 = vadd.f32 %v1236, %v1476
  %v1478 = vpop.f32.mrb[0].mxu0
  %1479 = vmatprep.mubr.f32.mxu0 0.0
  %1480 = vmatmul.mubr.f32.gmra.mrb[0].mxu0 %v1288
  %v1481 = vpop.f32.mrb[0].mxu0
  %v1482 = vadd.f32 %v1236, %v1481
  %v1483 = vpop.f32.mrb[0].mxu0
  %1484 = vmatprep.mubr.f32.mxu0 0.0
  %1485 = vmatmul.mubr.f32.gmra.mrb[0].mxu0 %v1291
  %v1486 = vpop.f32.mrb[0].mxu0
  %v1487 = vadd.f32 %v1236, %v1486
  %v1488 = vpop.f32.mrb[0].mxu0
  %1489 = vmatprep.mubr.f32.mxu0 0.0
  %1490 = vmatmul.mubr.f32.gmra.mrb[0].mxu0 %v1294
  %v1491 = vpop.f32.mrb[0].mxu0
  %v1492 = vadd.f32 %v1236, %v1491
  %v1493 = vpop.f32.mrb[0].mxu0
  %1494 = vmatprep.mubr.f32.mxu0 0.0
  %1495 = vmatmul.mubr.f32.gmra.mrb[0].mxu0 %v1297
  %v1496 = vpop.f32.mrb[0].mxu0
  %v1497 = vadd.f32 %v1236, %v1496
  %v1498 = vpop.f32.mrb[0].mxu0
  %1499 = vmatprep.mubr.f32.mxu0 0.0
  %1500 = vmatmul.mubr.f32.gmra.mrb[0].mxu0 %v1300
  %v1501 = vpop.f32.mrb[0].mxu0
  %v1502 = vadd.f32 %v1236, %v1501
  %v1503 = vpop.f32.mrb[0].mxu0
  %1504 = vmatprep.mubr.f32.mxu0 0.0
  %1505 = vmatmul.mubr.f32.gmra.mrb[0].mxu0 %v1303
  %v1506 = vpop.f32.mrb[0].mxu0
  %v1507 = vadd.f32 %v1236, %v1506
  %v1508 = vpop.f32.mrb[0].mxu0
  %1509 = vmatprep.mubr.f32.mxu0 0.0
  %1510 = vmatmul.mubr.f32.gmra.mrb[0].mxu0 %v1306
  %v1511 = vpop.f32.mrb[0].mxu0
  %v1512 = vadd.f32 %v1236, %v1511
  %v1513 = vpop.f32.mrb[0].mxu0
  %1514 = vmatprep.mubr.f32.mxu0 0.0
  %1515 = vmatmul.mubr.f32.gmra.mrb[0].mxu0 %v1309
  %v1516 = vpop.f32.mrb[0].mxu0
  %v1517 = vadd.f32 %v1236, %v1516
  %v1518 = vpop.f32.mrb[0].mxu0
  %1519 = vmatprep.mubr.f32.mxu0 0.0
  %1520 = vmatmul.mubr.f32.gmra.mrb[0].mxu0 %v1312
  %v1521 = vpop.f32.mrb[0].mxu0
  %v1522 = vadd.f32 %v1236, %v1521
  %v1523 = vpop.f32.mrb[0].mxu0
  %1524 = vmatprep.mubr.f32.mxu0 0.0
  %1525 = vmatmul.mubr.f32.gmra.mrb[0].mxu0 %v1315
  %v1526 = vpop.f32.mrb[0].mxu0
  %v1527 = vadd.f32 %v1236, %v1526
  %v1528 = vpop.f32.mrb[0].mxu0
  %1529 = vmatprep.mubr.f32.mxu0 0.0
  %1530 = vmatmul.mubr.f32.gmra.mrb[0].mxu0 %v1318
  %v1531 = vpop.f32.mrb[0].mxu0
  %v1532 = vadd.f32 %v1236, %v1531
  %v1533 = vpop.f32.mrb[0].mxu0
  %1534 = vmatprep.mubr.f32.mxu0 0.0
  %1535 = vmatmul.mubr.f32.gmra.mrb[0].mxu0 %v1321
  %v1536 = vpop.f32.mrb[0].mxu0
  %v1537 = vadd.f32 %v1236, %v1536
  %v1538 = vpop.f32.mrb[0].mxu0
  %1539 = vmatprep.mubr.f32.mxu0 0.0
  %1540 = vmatmul.mubr.f32.gmra.mrb[0].mxu0 %v1324
  %v1541 = vpop.f32.mrb[0].mxu0
  %v1542 = vadd.f32 %v1236, %v1541
  %v1543 = vpop.f32.mrb[0].mxu0
  %1544 = vmatprep.mubr.f32.mxu0 0.0
  %1545 = vmatmul.mubr.f32.gmra.mrb[0].mxu0 %v1327
  %v1546 = vpop.f32.mrb[0].mxu0
  %v1547 = vadd.f32 %v1236, %v1546
  %v1548 = vpop.f32.mrb[0].mxu0
  %1549 = vmatprep.mubr.f32.mxu0 0.0
  %1550 = vmatmul.mubr.f32.gmra.mrb[0].mxu0 %v1330
  %v1551 = vpop.f32.mrb[0].mxu0
  %v1552 = vadd.f32 %v1236, %v1551
  %v1553 = vpop.f32.mrb[0].mxu0
  %1554 = vmatprep.mubr.f32.mxu0 0.0
  %1555 = vmatmul.mubr.f32.gmra.mrb[0].mxu0 %v1333
  %v1556 = vpop.f32.mrb[0].mxu0
  %v1557 = vadd.f32 %v1236, %v1556
  %v1558 = vpop.f32.mrb[0].mxu0
  %1559 = vdwg.mxu0
  %v1560 = vtanh.pop %v1402
  %v1561 = vtanh.pop %v1407
  %v1562 = vtanh.pop %v1412
  %v1563 = vtanh.pop %v1417
  %v1564 = vtanh.pop %v1422
  %v1565 = vtanh.pop %v1427
  %v1566 = vtanh.pop %v1432
  %v1567 = vtanh.pop %v1437
  %v1568 = vtanh.pop %v1442
  %v1569 = vtanh.pop %v1447
  %v1570 = vtanh.pop %v1452
  %v1571 = vtanh.pop %v1457
  %v1572 = vtanh.pop %v1462
  %v1573 = vtanh.pop %v1467
  %v1574 = vtanh.pop %v1472
  %v1575 = vtanh.pop %v1477
  %v1576 = vtanh.pop %v1482
  %v1577 = vtanh.pop %v1487
  %v1578 = vtanh.pop %v1492
  %v1579 = vtanh.pop %v1497
  %v1580 = vtanh.pop %v1502
  %v1581 = vtanh.pop %v1507
  %v1582 = vtanh.pop %v1512
  %v1583 = vtanh.pop %v1517
  %v1584 = vtanh.pop %v1522
  %v1585 = vtanh.pop %v1527
  %v1586 = vtanh.pop %v1532
  %v1587 = vtanh.pop %v1537
  %v1588 = vtanh.pop %v1542
  %v1589 = vtanh.pop %v1547
  %v1590 = vtanh.pop %v1552
  %v1591 = vtanh.pop %v1557
  %v1592 = vld [vmem:[%s9] sm:$0xff]
  %v1593 = vld [vmem:[%s9 + $0x8] sm:$0xff]
  %v1594 = vld [vmem:[%s9 + $0x10] sm:$0xff]
  %v1595 = vld [vmem:[%s9 + $0x18] sm:$0xff]
  %v1596 = vld [vmem:[%s10] sm:$0x1]
  %v1598 = vlaneseq
  %v1599 = vshrl.u32 %v1598, 7
  %v1600 = vsub.s32 0, %v1599
  %v1601 = vrot.slane %v1596, %v1600
  %v1604 = vsel %vm1238, %v1560, 0
  %v1607 = vsel %vm1238, %v1561, 0
  %v1610 = vsel %vm1238, %v1562, 0
  %v1613 = vsel %vm1238, %v1563, 0
  %v1616 = vsel %vm1238, %v1564, 0
  %v1619 = vsel %vm1238, %v1565, 0
  %v1622 = vsel %vm1238, %v1566, 0
  %v1625 = vsel %vm1238, %v1567, 0
  %v1628 = vsel %vm1238, %v1568, 0
  %v1631 = vsel %vm1238, %v1569, 0
  %v1634 = vsel %vm1238, %v1570, 0
  %v1637 = vsel %vm1238, %v1571, 0
  %v1640 = vsel %vm1238, %v1572, 0
  %v1643 = vsel %vm1238, %v1573, 0
  %v1646 = vsel %vm1238, %v1574, 0
  %v1649 = vsel %vm1238, %v1575, 0
  %v1652 = vsel %vm1238, %v1576, 0
  %v1655 = vsel %vm1238, %v1577, 0
  %v1658 = vsel %vm1238, %v1578, 0
  %v1661 = vsel %vm1238, %v1579, 0
  %v1664 = vsel %vm1238, %v1580, 0
  %v1667 = vsel %vm1238, %v1581, 0
  %v1670 = vsel %vm1238, %v1582, 0
  %v1673 = vsel %vm1238, %v1583, 0
  %v1676 = vsel %vm1238, %v1584, 0
  %v1679 = vsel %vm1238, %v1585, 0
  %v1682 = vsel %vm1238, %v1586, 0
  %v1685 = vsel %vm1238, %v1587, 0
  %v1688 = vsel %vm1238, %v1588, 0
  %v1691 = vsel %vm1238, %v1589, 0
  %v1694 = vsel %vm1238, %v1590, 0
  %v1697 = vsel %vm1238, %v1591, 0
  %1699 = vmatprep.subr.mxu0 0.0
  %1700 = vmatpush1.msra.mxu0 %v1592
  %1701 = vmatprep.subr.mxu0 0.0
  %1702 = vmatpush1.msra.mxu0 %v1593
  %1703 = vmatprep.subr.mxu0 0.0
  %1704 = vmatpush1.msra.mxu0 %v1594
  %1705 = vmatprep.subr.mxu0 0.0
  %1706 = vmatpush1.msra.mxu0 %v1595
  %1707 = vmatprep.subr.mxu0 0.0
  %1708 = vmatpush1.msra.mxu0 0.0
  %1709 = vmatprep.subr.mxu0 0.0
  %1710 = vmatpush1.msra.mxu0 0.0
  %1711 = vmatprep.subr.mxu0 0.0
  %1712 = vmatpush1.msra.mxu0 0.0
  %1713 = vmatprep.subr.mxu0 0.0
  %1714 = vmatpush1.msra.mxu0 0.0
  %1715 = vmatprep.subr.mxu0 0.0
  %1716 = vmatpush1.msra.mxu0 0.0
  %1717 = vmatprep.subr.mxu0 0.0
  %1718 = vmatpush1.msra.mxu0 0.0
  %1719 = vmatprep.subr.mxu0 0.0
  %1720 = vmatpush1.msra.mxu0 0.0
  %1721 = vmatprep.subr.mxu0 0.0
  %1722 = vmatpush1.msra.mxu0 0.0
  %1723 = vmatprep.subr.mxu0 0.0
  %1724 = vmatpush1.msra.mxu0 0.0
  %1725 = vmatprep.subr.mxu0 0.0
  %1726 = vmatpush1.msra.mxu0 0.0
  %1727 = vmatprep.subr.mxu0 0.0
  %1728 = vmatpush1.msra.mxu0 0.0
  %1729 = vmatprep.subr.mxu0 0.0
  %1730 = vmatpush1.msra.mxu0 0.0
  %1731 = vmatprep.subr.mxu0 0.0
  %1732 = vmatpush1.msra.mxu0 0.0
  %1733 = vmatprep.subr.mxu0 0.0
  %1734 = vmatpush1.msra.mxu0 0.0
  %1735 = vmatprep.subr.mxu0 0.0
  %1736 = vmatpush1.msra.mxu0 0.0
  %1737 = vmatprep.subr.mxu0 0.0
  %1738 = vmatpush1.msra.mxu0 0.0
  %1739 = vmatprep.subr.mxu0 0.0
  %1740 = vmatpush1.msra.mxu0 0.0
  %1741 = vmatprep.subr.mxu0 0.0
  %1742 = vmatpush1.msra.mxu0 0.0
  %1743 = vmatprep.subr.mxu0 0.0
  %1744 = vmatpush1.msra.mxu0 0.0
  %1745 = vmatprep.subr.mxu0 0.0
  %1746 = vmatpush1.msra.mxu0 0.0
  %1747 = vmatprep.subr.mxu0 0.0
  %1748 = vmatpush1.msra.mxu0 0.0
  %1749 = vmatprep.subr.mxu0 0.0
  %1750 = vmatpush1.msra.mxu0 0.0
  %1751 = vmatprep.subr.mxu0 0.0
  %1752 = vmatpush1.msra.mxu0 0.0
  %1753 = vmatprep.subr.mxu0 0.0
  %1754 = vmatpush1.msra.mxu0 0.0
  %1755 = vmatprep.subr.mxu0 0.0
  %1756 = vmatpush1.msra.mxu0 0.0
  %1757 = vmatprep.subr.mxu0 0.0
  %1758 = vmatpush1.msra.mxu0 0.0
  %1759 = vmatprep.subr.mxu0 0.0
  %1760 = vmatpush1.msra.mxu0 0.0
  %1761 = vmatprep.subr.mxu0 0.0
  %1762 = vmatpush1.msra.mxu0 0.0
  %1763 = vmatprep.mubr.f32.mxu0 0.0
  %1764 = vmatmul.mubr.f32.gmra.mrb[0].mxu0 %v1604
  %v1765 = vpop.f32.mrb[0].mxu0
  %v1766 = vadd.f32 %v1601, %v1765
  %v1767 = vpop.f32.mrb[0].mxu0
  %1768 = vmatprep.mubr.f32.mxu0 0.0
  %1769 = vmatmul.mubr.f32.gmra.mrb[0].mxu0 %v1607
  %v1770 = vpop.f32.mrb[0].mxu0
  %v1771 = vadd.f32 %v1601, %v1770
  %v1772 = vpop.f32.mrb[0].mxu0
  %1773 = vmatprep.mubr.f32.mxu0 0.0
  %1774 = vmatmul.mubr.f32.gmra.mrb[0].mxu0 %v1610
  %v1775 = vpop.f32.mrb[0].mxu0
  %v1776 = vadd.f32 %v1601, %v1775
  %v1777 = vpop.f32.mrb[0].mxu0
  %1778 = vmatprep.mubr.f32.mxu0 0.0
  %1779 = vmatmul.mubr.f32.gmra.mrb[0].mxu0 %v1613
  %v1780 = vpop.f32.mrb[0].mxu0
  %v1781 = vadd.f32 %v1601, %v1780
  %v1782 = vpop.f32.mrb[0].mxu0
  %1783 = vmatprep.mubr.f32.mxu0 0.0
  %1784 = vmatmul.mubr.f32.gmra.mrb[0].mxu0 %v1616
  %v1785 = vpop.f32.mrb[0].mxu0
  %v1786 = vadd.f32 %v1601, %v1785
  %v1787 = vpop.f32.mrb[0].mxu0
  %1788 = vmatprep.mubr.f32.mxu0 0.0
  %1789 = vmatmul.mubr.f32.gmra.mrb[0].mxu0 %v1619
  %v1790 = vpop.f32.mrb[0].mxu0
  %v1791 = vadd.f32 %v1601, %v1790
  %v1792 = vpop.f32.mrb[0].mxu0
  %1793 = vmatprep.mubr.f32.mxu0 0.0
  %1794 = vmatmul.mubr.f32.gmra.mrb[0].mxu0 %v1622
  %v1795 = vpop.f32.mrb[0].mxu0
  %v1796 = vadd.f32 %v1601, %v1795
  %v1797 = vpop.f32.mrb[0].mxu0
  %1798 = vmatprep.mubr.f32.mxu0 0.0
  %1799 = vmatmul.mubr.f32.gmra.mrb[0].mxu0 %v1625
  %v1800 = vpop.f32.mrb[0].mxu0
  %v1801 = vadd.f32 %v1601, %v1800
  %v1802 = vpop.f32.mrb[0].mxu0
  %1803 = vmatprep.mubr.f32.mxu0 0.0
  %1804 = vmatmul.mubr.f32.gmra.mrb[0].mxu0 %v1628
  %v1805 = vpop.f32.mrb[0].mxu0
  %v1806 = vadd.f32 %v1601, %v1805
  %v1807 = vpop.f32.mrb[0].mxu0
  %1808 = vmatprep.mubr.f32.mxu0 0.0
  %1809 = vmatmul.mubr.f32.gmra.mrb[0].mxu0 %v1631
  %v1810 = vpop.f32.mrb[0].mxu0
  %v1811 = vadd.f32 %v1601, %v1810
  %v1812 = vpop.f32.mrb[0].mxu0
  %1813 = vmatprep.mubr.f32.mxu0 0.0
  %1814 = vmatmul.mubr.f32.gmra.mrb[0].mxu0 %v1634
  %v1815 = vpop.f32.mrb[0].mxu0
  %v1816 = vadd.f32 %v1601, %v1815
  %v1817 = vpop.f32.mrb[0].mxu0
  %1818 = vmatprep.mubr.f32.mxu0 0.0
  %1819 = vmatmul.mubr.f32.gmra.mrb[0].mxu0 %v1637
  %v1820 = vpop.f32.mrb[0].mxu0
  %v1821 = vadd.f32 %v1601, %v1820
  %v1822 = vpop.f32.mrb[0].mxu0
  %1823 = vmatprep.mubr.f32.mxu0 0.0
  %1824 = vmatmul.mubr.f32.gmra.mrb[0].mxu0 %v1640
  %v1825 = vpop.f32.mrb[0].mxu0
  %v1826 = vadd.f32 %v1601, %v1825
  %v1827 = vpop.f32.mrb[0].mxu0
  %1828 = vmatprep.mubr.f32.mxu0 0.0
  %1829 = vmatmul.mubr.f32.gmra.mrb[0].mxu0 %v1643
  %v1830 = vpop.f32.mrb[0].mxu0
  %v1831 = vadd.f32 %v1601, %v1830
  %v1832 = vpop.f32.mrb[0].mxu0
  %1833 = vmatprep.mubr.f32.mxu0 0.0
  %1834 = vmatmul.mubr.f32.gmra.mrb[0].mxu0 %v1646
  %v1835 = vpop.f32.mrb[0].mxu0
  %v1836 = vadd.f32 %v1601, %v1835
  %v1837 = vpop.f32.mrb[0].mxu0
  %1838 = vmatprep.mubr.f32.mxu0 0.0
  %1839 = vmatmul.mubr.f32.gmra.mrb[0].mxu0 %v1649
  %v1840 = vpop.f32.mrb[0].mxu0
  %v1841 = vadd.f32 %v1601, %v1840
  %v1842 = vpop.f32.mrb[0].mxu0
  %1843 = vmatprep.mubr.f32.mxu0 0.0
  %1844 = vmatmul.mubr.f32.gmra.mrb[0].mxu0 %v1652
  %v1845 = vpop.f32.mrb[0].mxu0
  %v1846 = vadd.f32 %v1601, %v1845
  %v1847 = vpop.f32.mrb[0].mxu0
  %1848 = vmatprep.mubr.f32.mxu0 0.0
  %1849 = vmatmul.mubr.f32.gmra.mrb[0].mxu0 %v1655
  %v1850 = vpop.f32.mrb[0].mxu0
  %v1851 = vadd.f32 %v1601, %v1850
  %v1852 = vpop.f32.mrb[0].mxu0
  %1853 = vmatprep.mubr.f32.mxu0 0.0
  %1854 = vmatmul.mubr.f32.gmra.mrb[0].mxu0 %v1658
  %v1855 = vpop.f32.mrb[0].mxu0
  %v1856 = vadd.f32 %v1601, %v1855
  %v1857 = vpop.f32.mrb[0].mxu0
  %1858 = vmatprep.mubr.f32.mxu0 0.0
  %1859 = vmatmul.mubr.f32.gmra.mrb[0].mxu0 %v1661
  %v1860 = vpop.f32.mrb[0].mxu0
  %v1861 = vadd.f32 %v1601, %v1860
  %v1862 = vpop.f32.mrb[0].mxu0
  %1863 = vmatprep.mubr.f32.mxu0 0.0
  %1864 = vmatmul.mubr.f32.gmra.mrb[0].mxu0 %v1664
  %v1865 = vpop.f32.mrb[0].mxu0
  %v1866 = vadd.f32 %v1601, %v1865
  %v1867 = vpop.f32.mrb[0].mxu0
  %1868 = vmatprep.mubr.f32.mxu0 0.0
  %1869 = vmatmul.mubr.f32.gmra.mrb[0].mxu0 %v1667
  %v1870 = vpop.f32.mrb[0].mxu0
  %v1871 = vadd.f32 %v1601, %v1870
  %v1872 = vpop.f32.mrb[0].mxu0
  %1873 = vmatprep.mubr.f32.mxu0 0.0
  %1874 = vmatmul.mubr.f32.gmra.mrb[0].mxu0 %v1670
  %v1875 = vpop.f32.mrb[0].mxu0
  %v1876 = vadd.f32 %v1601, %v1875
  %v1877 = vpop.f32.mrb[0].mxu0
  %1878 = vmatprep.mubr.f32.mxu0 0.0
  %1879 = vmatmul.mubr.f32.gmra.mrb[0].mxu0 %v1673
  %v1880 = vpop.f32.mrb[0].mxu0
  %v1881 = vadd.f32 %v1601, %v1880
  %v1882 = vpop.f32.mrb[0].mxu0
  %1883 = vmatprep.mubr.f32.mxu0 0.0
  %1884 = vmatmul.mubr.f32.gmra.mrb[0].mxu0 %v1676
  %v1885 = vpop.f32.mrb[0].mxu0
  %v1886 = vadd.f32 %v1601, %v1885
  %v1887 = vpop.f32.mrb[0].mxu0
  %1888 = vmatprep.mubr.f32.mxu0 0.0
  %1889 = vmatmul.mubr.f32.gmra.mrb[0].mxu0 %v1679
  %v1890 = vpop.f32.mrb[0].mxu0
  %v1891 = vadd.f32 %v1601, %v1890
  %v1892 = vpop.f32.mrb[0].mxu0
  %1893 = vmatprep.mubr.f32.mxu0 0.0
  %1894 = vmatmul.mubr.f32.gmra.mrb[0].mxu0 %v1682
  %v1895 = vpop.f32.mrb[0].mxu0
  %v1896 = vadd.f32 %v1601, %v1895
  %v1897 = vpop.f32.mrb[0].mxu0
  %1898 = vmatprep.mubr.f32.mxu0 0.0
  %1899 = vmatmul.mubr.f32.gmra.mrb[0].mxu0 %v1685
  %v1900 = vpop.f32.mrb[0].mxu0
  %v1901 = vadd.f32 %v1601, %v1900
  %v1902 = vpop.f32.mrb[0].mxu0
  %1903 = vmatprep.mubr.f32.mxu0 0.0
  %1904 = vmatmul.mubr.f32.gmra.mrb[0].mxu0 %v1688
  %v1905 = vpop.f32.mrb[0].mxu0
  %v1906 = vadd.f32 %v1601, %v1905
  %v1907 = vpop.f32.mrb[0].mxu0
  %1908 = vmatprep.mubr.f32.mxu0 0.0
  %1909 = vmatmul.mubr.f32.gmra.mrb[0].mxu0 %v1691
  %v1910 = vpop.f32.mrb[0].mxu0
  %v1911 = vadd.f32 %v1601, %v1910
  %v1912 = vpop.f32.mrb[0].mxu0
  %1913 = vmatprep.mubr.f32.mxu0 0.0
  %1914 = vmatmul.mubr.f32.gmra.mrb[0].mxu0 %v1694
  %v1915 = vpop.f32.mrb[0].mxu0
  %v1916 = vadd.f32 %v1601, %v1915
  %v1917 = vpop.f32.mrb[0].mxu0
  %1918 = vmatprep.mubr.f32.mxu0 0.0
  %1919 = vmatmul.mubr.f32.gmra.mrb[0].mxu0 %v1697
  %v1920 = vpop.f32.mrb[0].mxu0
  %v1921 = vadd.f32 %v1601, %v1920
  %v1922 = vpop.f32.mrb[0].mxu0
  %1923 = vdwg.mxu0
  %v1924 = vld [vmem:[%s13] sm:$0xff]
  %v1925 = vld [vmem:[%s13 + $0x8] sm:$0xff]
  %v1926 = vld [vmem:[%s13 + $0x10] sm:$0xff]
  %v1927 = vld [vmem:[%s13 + $0x18] sm:$0xff]
  %v1928 = vld [vmem:[%s13 + $0x20] sm:$0xff]
  %v1929 = vld [vmem:[%s13 + $0x28] sm:$0xff]
  %v1930 = vld [vmem:[%s13 + $0x30] sm:$0xff]
  %v1931 = vld [vmem:[%s13 + $0x38] sm:$0xff]
  %v1932 = vld [vmem:[%s13 + $0x40] sm:$0xff]
  %v1933 = vld [vmem:[%s13 + $0x48] sm:$0xff]
  %v1934 = vld [vmem:[%s13 + $0x50] sm:$0xff]
  %v1935 = vld [vmem:[%s13 + $0x58] sm:$0xff]
  %v1936 = vld [vmem:[%s13 + $0x60] sm:$0xff]
  %v1937 = vld [vmem:[%s13 + $0x68] sm:$0xff]
  %v1938 = vld [vmem:[%s13 + $0x70] sm:$0xff]
  %v1939 = vld [vmem:[%s13 + $0x78] sm:$0xff]
  %v1940 = vld [vmem:[%s13 + $0x80] sm:$0xff]
  %v1941 = vld [vmem:[%s13 + $0x88] sm:$0xff]
  %v1942 = vld [vmem:[%s13 + $0x90] sm:$0xff]
  %v1943 = vld [vmem:[%s13 + $0x98] sm:$0xff]
  %v1944 = vld [vmem:[%s13 + $0xa0] sm:$0xff]
  %v1945 = vld [vmem:[%s13 + $0xa8] sm:$0xff]
  %v1946 = vld [vmem:[%s13 + $0xb0] sm:$0xff]
  %v1947 = vld [vmem:[%s13 + $0xb8] sm:$0xff]
  %v1948 = vld [vmem:[%s13 + $0xc0] sm:$0xff]
  %v1949 = vld [vmem:[%s13 + $0xc8] sm:$0xff]
  %v1950 = vld [vmem:[%s13 + $0xd0] sm:$0xff]
  %v1951 = vld [vmem:[%s13 + $0xd8] sm:$0xff]
  %v1952 = vld [vmem:[%s13 + $0xe0] sm:$0xff]
  %v1953 = vld [vmem:[%s13 + $0xe8] sm:$0xff]
  %v1954 = vld [vmem:[%s13 + $0xf0] sm:$0xff]
  %v1955 = vld [vmem:[%s13 + $0xf8] sm:$0xff]
  %v1956 = vld [vmem:[%s11] sm:$0x1]
  %v1958 = vlaneseq
  %v1959 = vshrl.u32 %v1958, 7
  %v1960 = vsub.s32 0, %v1959
  %v1961 = vrot.slane %v1956, %v1960
  %v1963 = vmul.f32 %v1961, %v1924
  %v1964 = vmul.f32 %v1961, %v1925
  %v1965 = vmul.f32 %v1961, %v1926
  %v1966 = vmul.f32 %v1961, %v1927
  %v1967 = vmul.f32 %v1961, %v1928
  %v1968 = vmul.f32 %v1961, %v1929
  %v1969 = vmul.f32 %v1961, %v1930
  %v1970 = vmul.f32 %v1961, %v1931
  %v1971 = vmul.f32 %v1961, %v1932
  %v1972 = vmul.f32 %v1961, %v1933
  %v1973 = vmul.f32 %v1961, %v1934
  %v1974 = vmul.f32 %v1961, %v1935
  %v1975 = vmul.f32 %v1961, %v1936
  %v1976 = vmul.f32 %v1961, %v1937
  %v1977 = vmul.f32 %v1961, %v1938
  %v1978 = vmul.f32 %v1961, %v1939
  %v1979 = vmul.f32 %v1961, %v1940
  %v1980 = vmul.f32 %v1961, %v1941
  %v1981 = vmul.f32 %v1961, %v1942
  %v1982 = vmul.f32 %v1961, %v1943
  %v1983 = vmul.f32 %v1961, %v1944
  %v1984 = vmul.f32 %v1961, %v1945
  %v1985 = vmul.f32 %v1961, %v1946
  %v1986 = vmul.f32 %v1961, %v1947
  %v1987 = vmul.f32 %v1961, %v1948
  %v1988 = vmul.f32 %v1961, %v1949
  %v1989 = vmul.f32 %v1961, %v1950
  %v1990 = vmul.f32 %v1961, %v1951
  %v1991 = vmul.f32 %v1961, %v1952
  %v1992 = vmul.f32 %v1961, %v1953
  %v1993 = vmul.f32 %v1961, %v1954
  %v1994 = vmul.f32 %v1961, %v1955
  %v1995 = vadd.f32 %v1766, %v1963
  %v1996 = vadd.f32 %v1771, %v1964
  %v1997 = vadd.f32 %v1776, %v1965
  %v1998 = vadd.f32 %v1781, %v1966
  %v1999 = vadd.f32 %v1786, %v1967
  %v2000 = vadd.f32 %v1791, %v1968
  %v2001 = vadd.f32 %v1796, %v1969
  %v2002 = vadd.f32 %v1801, %v1970
  %v2003 = vadd.f32 %v1806, %v1971
  %v2004 = vadd.f32 %v1811, %v1972
  %v2005 = vadd.f32 %v1816, %v1973
  %v2006 = vadd.f32 %v1821, %v1974
  %v2007 = vadd.f32 %v1826, %v1975
  %v2008 = vadd.f32 %v1831, %v1976
  %v2009 = vadd.f32 %v1836, %v1977
  %v2010 = vadd.f32 %v1841, %v1978
  %v2011 = vadd.f32 %v1846, %v1979
  %v2012 = vadd.f32 %v1851, %v1980
  %v2013 = vadd.f32 %v1856, %v1981
  %v2014 = vadd.f32 %v1861, %v1982
  %v2015 = vadd.f32 %v1866, %v1983
  %v2016 = vadd.f32 %v1871, %v1984
  %v2017 = vadd.f32 %v1876, %v1985
  %v2018 = vadd.f32 %v1881, %v1986
  %v2019 = vadd.f32 %v1886, %v1987
  %v2020 = vadd.f32 %v1891, %v1988
  %v2021 = vadd.f32 %v1896, %v1989
  %v2022 = vadd.f32 %v1901, %v1990
  %v2023 = vadd.f32 %v1906, %v1991
  %v2024 = vadd.f32 %v1911, %v1992
  %v2025 = vadd.f32 %v1916, %v1993
  %v2026 = vadd.f32 %v1921, %v1994
  %v2027 = vmul.f32 %v1924, %v1924
  %v2028 = vmul.f32 %v1925, %v1925
  %v2029 = vmul.f32 %v1926, %v1926
  %v2030 = vmul.f32 %v1927, %v1927
  %v2031 = vmul.f32 %v1928, %v1928
  %v2032 = vmul.f32 %v1929, %v1929
  %v2033 = vmul.f32 %v1930, %v1930
  %v2034 = vmul.f32 %v1931, %v1931
  %v2035 = vmul.f32 %v1932, %v1932
  %v2036 = vmul.f32 %v1933, %v1933
  %v2037 = vmul.f32 %v1934, %v1934
  %v2038 = vmul.f32 %v1935, %v1935
  %v2039 = vmul.f32 %v1936, %v1936
  %v2040 = vmul.f32 %v1937, %v1937
  %v2041 = vmul.f32 %v1938, %v1938
  %v2042 = vmul.f32 %v1939, %v1939
  %v2043 = vmul.f32 %v1940, %v1940
  %v2044 = vmul.f32 %v1941, %v1941
  %v2045 = vmul.f32 %v1942, %v1942
  %v2046 = vmul.f32 %v1943, %v1943
  %v2047 = vmul.f32 %v1944, %v1944
  %v2048 = vmul.f32 %v1945, %v1945
  %v2049 = vmul.f32 %v1946, %v1946
  %v2050 = vmul.f32 %v1947, %v1947
  %v2051 = vmul.f32 %v1948, %v1948
  %v2052 = vmul.f32 %v1949, %v1949
  %v2053 = vmul.f32 %v1950, %v1950
  %v2054 = vmul.f32 %v1951, %v1951
  %v2055 = vmul.f32 %v1952, %v1952
  %v2056 = vmul.f32 %v1953, %v1953
  %v2057 = vmul.f32 %v1954, %v1954
  %v2058 = vmul.f32 %v1955, %v1955
  %v2059 = vsel %vm798, %v2027, 0.0
  %2060 = vadd.xlane.f32.xlu0 %v2059
  %v2061 = vpop.xlane.xlu0 %2060
  %v2062 = vsel %vm798, %v2028, 0.0
  %2063 = vadd.xlane.f32.xlu0 %v2062
  %v2064 = vpop.xlane.xlu0 %2063
  %v2065 = vsel %vm798, %v2029, 0.0
  %2066 = vadd.xlane.f32.xlu0 %v2065
  %v2067 = vpop.xlane.xlu0 %2066
  %v2068 = vsel %vm798, %v2030, 0.0
  %2069 = vadd.xlane.f32.xlu0 %v2068
  %v2070 = vpop.xlane.xlu0 %2069
  %v2071 = vsel %vm798, %v2031, 0.0
  %2072 = vadd.xlane.f32.xlu0 %v2071
  %v2073 = vpop.xlane.xlu0 %2072
  %v2074 = vsel %vm798, %v2032, 0.0
  %2075 = vadd.xlane.f32.xlu0 %v2074
  %v2076 = vpop.xlane.xlu0 %2075
  %v2077 = vsel %vm798, %v2033, 0.0
  %2078 = vadd.xlane.f32.xlu0 %v2077
  %v2079 = vpop.xlane.xlu0 %2078
  %v2080 = vsel %vm798, %v2034, 0.0
  %2081 = vadd.xlane.f32.xlu0 %v2080
  %v2082 = vpop.xlane.xlu0 %2081
  %v2083 = vsel %vm798, %v2035, 0.0
  %2084 = vadd.xlane.f32.xlu0 %v2083
  %v2085 = vpop.xlane.xlu0 %2084
  %v2086 = vsel %vm798, %v2036, 0.0
  %2087 = vadd.xlane.f32.xlu0 %v2086
  %v2088 = vpop.xlane.xlu0 %2087
  %v2089 = vsel %vm798, %v2037, 0.0
  %2090 = vadd.xlane.f32.xlu0 %v2089
  %v2091 = vpop.xlane.xlu0 %2090
  %v2092 = vsel %vm798, %v2038, 0.0
  %2093 = vadd.xlane.f32.xlu0 %v2092
  %v2094 = vpop.xlane.xlu0 %2093
  %v2095 = vsel %vm798, %v2039, 0.0
  %2096 = vadd.xlane.f32.xlu0 %v2095
  %v2097 = vpop.xlane.xlu0 %2096
  %v2098 = vsel %vm798, %v2040, 0.0
  %2099 = vadd.xlane.f32.xlu0 %v2098
  %v2100 = vpop.xlane.xlu0 %2099
  %v2101 = vsel %vm798, %v2041, 0.0
  %2102 = vadd.xlane.f32.xlu0 %v2101
  %v2103 = vpop.xlane.xlu0 %2102
  %v2104 = vsel %vm798, %v2042, 0.0
  %2105 = vadd.xlane.f32.xlu0 %v2104
  %v2106 = vpop.xlane.xlu0 %2105
  %v2107 = vsel %vm798, %v2043, 0.0
  %2108 = vadd.xlane.f32.xlu0 %v2107
  %v2109 = vpop.xlane.xlu0 %2108
  %v2110 = vsel %vm798, %v2044, 0.0
  %2111 = vadd.xlane.f32.xlu0 %v2110
  %v2112 = vpop.xlane.xlu0 %2111
  %v2113 = vsel %vm798, %v2045, 0.0
  %2114 = vadd.xlane.f32.xlu0 %v2113
  %v2115 = vpop.xlane.xlu0 %2114
  %v2116 = vsel %vm798, %v2046, 0.0
  %2117 = vadd.xlane.f32.xlu0 %v2116
  %v2118 = vpop.xlane.xlu0 %2117
  %v2119 = vsel %vm798, %v2047, 0.0
  %2120 = vadd.xlane.f32.xlu0 %v2119
  %v2121 = vpop.xlane.xlu0 %2120
  %v2122 = vsel %vm798, %v2048, 0.0
  %2123 = vadd.xlane.f32.xlu0 %v2122
  %v2124 = vpop.xlane.xlu0 %2123
  %v2125 = vsel %vm798, %v2049, 0.0
  %2126 = vadd.xlane.f32.xlu0 %v2125
  %v2127 = vpop.xlane.xlu0 %2126
  %v2128 = vsel %vm798, %v2050, 0.0
  %2129 = vadd.xlane.f32.xlu0 %v2128
  %v2130 = vpop.xlane.xlu0 %2129
  %v2131 = vsel %vm798, %v2051, 0.0
  %2132 = vadd.xlane.f32.xlu0 %v2131
  %v2133 = vpop.xlane.xlu0 %2132
  %v2134 = vsel %vm798, %v2052, 0.0
  %2135 = vadd.xlane.f32.xlu0 %v2134
  %v2136 = vpop.xlane.xlu0 %2135
  %v2137 = vsel %vm798, %v2053, 0.0
  %2138 = vadd.xlane.f32.xlu0 %v2137
  %v2139 = vpop.xlane.xlu0 %2138
  %v2140 = vsel %vm798, %v2054, 0.0
  %2141 = vadd.xlane.f32.xlu0 %v2140
  %v2142 = vpop.xlane.xlu0 %2141
  %v2143 = vsel %vm798, %v2055, 0.0
  %2144 = vadd.xlane.f32.xlu0 %v2143
  %v2145 = vpop.xlane.xlu0 %2144
  %v2146 = vsel %vm798, %v2056, 0.0
  %2147 = vadd.xlane.f32.xlu0 %v2146
  %v2148 = vpop.xlane.xlu0 %2147
  %v2149 = vsel %vm798, %v2057, 0.0
  %2150 = vadd.xlane.f32.xlu0 %v2149
  %v2151 = vpop.xlane.xlu0 %2150
  %v2152 = vsel %vm798, %v2058, 0.0
  %2153 = vadd.xlane.f32.xlu0 %v2152
  %v2154 = vpop.xlane.xlu0 %2153
  %v2155 = vmul.f32 %v2061, -0.5
  %v2156 = vmul.f32 %v2064, -0.5
  %v2157 = vmul.f32 %v2067, -0.5
  %v2158 = vmul.f32 %v2070, -0.5
  %v2159 = vmul.f32 %v2073, -0.5
  %v2160 = vmul.f32 %v2076, -0.5
  %v2161 = vmul.f32 %v2079, -0.5
  %v2162 = vmul.f32 %v2082, -0.5
  %v2163 = vmul.f32 %v2085, -0.5
  %v2164 = vmul.f32 %v2088, -0.5
  %v2165 = vmul.f32 %v2091, -0.5
  %v2166 = vmul.f32 %v2094, -0.5
  %v2167 = vmul.f32 %v2097, -0.5
  %v2168 = vmul.f32 %v2100, -0.5
  %v2169 = vmul.f32 %v2103, -0.5
  %v2170 = vmul.f32 %v2106, -0.5
  %v2171 = vmul.f32 %v2109, -0.5
  %v2172 = vmul.f32 %v2112, -0.5
  %v2173 = vmul.f32 %v2115, -0.5
  %v2174 = vmul.f32 %v2118, -0.5
  %v2175 = vmul.f32 %v2121, -0.5
  %v2176 = vmul.f32 %v2124, -0.5
  %v2177 = vmul.f32 %v2127, -0.5
  %v2178 = vmul.f32 %v2130, -0.5
  %v2179 = vmul.f32 %v2133, -0.5
  %v2180 = vmul.f32 %v2136, -0.5
  %v2181 = vmul.f32 %v2139, -0.5
  %v2182 = vmul.f32 %v2142, -0.5
  %v2183 = vmul.f32 %v2145, -0.5
  %v2184 = vmul.f32 %v2148, -0.5
  %v2185 = vmul.f32 %v2151, -0.5
  %v2186 = vmul.f32 %v2154, -0.5
  %v2187 = vld [vmem:[#allocation2] sm:$0x1]
  %v2189 = vlaneseq
  %v2190 = vshrl.u32 %v2189, 7
  %v2191 = vsub.s32 0, %v2190
  %v2192 = vrot.slane %v2187, %v2191
  %v2194 = vsub.f32 %v2155, %v2192
  %v2195 = vsub.f32 %v2156, %v2192
  %v2196 = vsub.f32 %v2157, %v2192
  %v2197 = vsub.f32 %v2158, %v2192
  %v2198 = vsub.f32 %v2159, %v2192
  %v2199 = vsub.f32 %v2160, %v2192
  %v2200 = vsub.f32 %v2161, %v2192
  %v2201 = vsub.f32 %v2162, %v2192
  %v2202 = vsub.f32 %v2163, %v2192
  %v2203 = vsub.f32 %v2164, %v2192
  %v2204 = vsub.f32 %v2165, %v2192
  %v2205 = vsub.f32 %v2166, %v2192
  %v2206 = vsub.f32 %v2167, %v2192
  %v2207 = vsub.f32 %v2168, %v2192
  %v2208 = vsub.f32 %v2169, %v2192
  %v2209 = vsub.f32 %v2170, %v2192
  %v2210 = vsub.f32 %v2171, %v2192
  %v2211 = vsub.f32 %v2172, %v2192
  %v2212 = vsub.f32 %v2173, %v2192
  %v2213 = vsub.f32 %v2174, %v2192
  %v2214 = vsub.f32 %v2175, %v2192
  %v2215 = vsub.f32 %v2176, %v2192
  %v2216 = vsub.f32 %v2177, %v2192
  %v2217 = vsub.f32 %v2178, %v2192
  %v2218 = vsub.f32 %v2179, %v2192
  %v2219 = vsub.f32 %v2180, %v2192
  %v2220 = vsub.f32 %v2181, %v2192
  %v2221 = vsub.f32 %v2182, %v2192
  %v2222 = vsub.f32 %v2183, %v2192
  %v2223 = vsub.f32 %v2184, %v2192
  %v2224 = vsub.f32 %v2185, %v2192
  %v2225 = vsub.f32 %v2186, %v2192
  %v2226 = vmul.f32 %v2194, 1.442695
  %v2227 = vpow.pop %v2226
  %v2228 = vmul.f32 %v2195, 1.442695
  %v2229 = vpow.pop %v2228
  %v2230 = vmul.f32 %v2196, 1.442695
  %v2231 = vpow.pop %v2230
  %v2232 = vmul.f32 %v2197, 1.442695
  %v2233 = vpow.pop %v2232
  %v2234 = vmul.f32 %v2198, 1.442695
  %v2235 = vpow.pop %v2234
  %v2236 = vmul.f32 %v2199, 1.442695
  %v2237 = vpow.pop %v2236
  %v2238 = vmul.f32 %v2200, 1.442695
  %v2239 = vpow.pop %v2238
  %v2240 = vmul.f32 %v2201, 1.442695
  %v2241 = vpow.pop %v2240
  %v2242 = vmul.f32 %v2202, 1.442695
  %v2243 = vpow.pop %v2242
  %v2244 = vmul.f32 %v2203, 1.442695
  %v2245 = vpow.pop %v2244
  %v2246 = vmul.f32 %v2204, 1.442695
  %v2247 = vpow.pop %v2246
  %v2248 = vmul.f32 %v2205, 1.442695
  %v2249 = vpow.pop %v2248
  %v2250 = vmul.f32 %v2206, 1.442695
  %v2251 = vpow.pop %v2250
  %v2252 = vmul.f32 %v2207, 1.442695
  %v2253 = vpow.pop %v2252
  %v2254 = vmul.f32 %v2208, 1.442695
  %v2255 = vpow.pop %v2254
  %v2256 = vmul.f32 %v2209, 1.442695
  %v2257 = vpow.pop %v2256
  %v2258 = vmul.f32 %v2210, 1.442695
  %v2259 = vpow.pop %v2258
  %v2260 = vmul.f32 %v2211, 1.442695
  %v2261 = vpow.pop %v2260
  %v2262 = vmul.f32 %v2212, 1.442695
  %v2263 = vpow.pop %v2262
  %v2264 = vmul.f32 %v2213, 1.442695
  %v2265 = vpow.pop %v2264
  %v2266 = vmul.f32 %v2214, 1.442695
  %v2267 = vpow.pop %v2266
  %v2268 = vmul.f32 %v2215, 1.442695
  %v2269 = vpow.pop %v2268
  %v2270 = vmul.f32 %v2216, 1.442695
  %v2271 = vpow.pop %v2270
  %v2272 = vmul.f32 %v2217, 1.442695
  %v2273 = vpow.pop %v2272
  %v2274 = vmul.f32 %v2218, 1.442695
  %v2275 = vpow.pop %v2274
  %v2276 = vmul.f32 %v2219, 1.442695
  %v2277 = vpow.pop %v2276
  %v2278 = vmul.f32 %v2220, 1.442695
  %v2279 = vpow.pop %v2278
  %v2280 = vmul.f32 %v2221, 1.442695
  %v2281 = vpow.pop %v2280
  %v2282 = vmul.f32 %v2222, 1.442695
  %v2283 = vpow.pop %v2282
  %v2284 = vmul.f32 %v2223, 1.442695
  %v2285 = vpow.pop %v2284
  %v2286 = vmul.f32 %v2224, 1.442695
  %v2287 = vpow.pop %v2286
  %v2288 = vmul.f32 %v2225, 1.442695
  %v2289 = vpow.pop %v2288
  %2290 = vst.msk [vmem:[%s14] sm:$0xff] %vm798, %v1995
  %2291 = vst.msk [vmem:[%s14 + $0x8] sm:$0xff] %vm798, %v1996
  %2292 = vst.msk [vmem:[%s14 + $0x10] sm:$0xff] %vm798, %v1997
  %2293 = vst.msk [vmem:[%s14 + $0x18] sm:$0xff] %vm798, %v1998
  %2294 = vst.msk [vmem:[%s14 + $0x20] sm:$0xff] %vm798, %v1999
  %2295 = vst.msk [vmem:[%s14 + $0x28] sm:$0xff] %vm798, %v2000
  %2296 = vst.msk [vmem:[%s14 + $0x30] sm:$0xff] %vm798, %v2001
  %2297 = vst.msk [vmem:[%s14 + $0x38] sm:$0xff] %vm798, %v2002
  %2298 = vst.msk [vmem:[%s14 + $0x40] sm:$0xff] %vm798, %v2003
  %2299 = vst.msk [vmem:[%s14 + $0x48] sm:$0xff] %vm798, %v2004
  %2300 = vst.msk [vmem:[%s14 + $0x50] sm:$0xff] %vm798, %v2005
  %2301 = vst.msk [vmem:[%s14 + $0x58] sm:$0xff] %vm798, %v2006
  %2302 = vst.msk [vmem:[%s14 + $0x60] sm:$0xff] %vm798, %v2007
  %2303 = vst.msk [vmem:[%s14 + $0x68] sm:$0xff] %vm798, %v2008
  %2304 = vst.msk [vmem:[%s14 + $0x70] sm:$0xff] %vm798, %v2009
  %2305 = vst.msk [vmem:[%s14 + $0x78] sm:$0xff] %vm798, %v2010
  %2306 = vst.msk [vmem:[%s14 + $0x80] sm:$0xff] %vm798, %v2011
  %2307 = vst.msk [vmem:[%s14 + $0x88] sm:$0xff] %vm798, %v2012
  %2308 = vst.msk [vmem:[%s14 + $0x90] sm:$0xff] %vm798, %v2013
  %2309 = vst.msk [vmem:[%s14 + $0x98] sm:$0xff] %vm798, %v2014
  %2310 = vst.msk [vmem:[%s14 + $0xa0] sm:$0xff] %vm798, %v2015
  %2311 = vst.msk [vmem:[%s14 + $0xa8] sm:$0xff] %vm798, %v2016
  %2312 = vst.msk [vmem:[%s14 + $0xb0] sm:$0xff] %vm798, %v2017
  %2313 = vst.msk [vmem:[%s14 + $0xb8] sm:$0xff] %vm798, %v2018
  %2314 = vst.msk [vmem:[%s14 + $0xc0] sm:$0xff] %vm798, %v2019
  %2315 = vst.msk [vmem:[%s14 + $0xc8] sm:$0xff] %vm798, %v2020
  %2316 = vst.msk [vmem:[%s14 + $0xd0] sm:$0xff] %vm798, %v2021
  %2317 = vst.msk [vmem:[%s14 + $0xd8] sm:$0xff] %vm798, %v2022
  %2318 = vst.msk [vmem:[%s14 + $0xe0] sm:$0xff] %vm798, %v2023
  %2319 = vst.msk [vmem:[%s14 + $0xe8] sm:$0xff] %vm798, %v2024
  %2320 = vst.msk [vmem:[%s14 + $0xf0] sm:$0xff] %vm798, %v2025
  %2321 = vst.msk [vmem:[%s14 + $0xf8] sm:$0xff] %vm798, %v2026
  %2354 = vrot.lane.b32.xlu0 %v1766, 4
  %v2355 = vpop.permute.xlu0 %2354
  %2356 = vrot.lane.b32.xlu0 %v1771, 4
  %v2357 = vpop.permute.xlu0 %2356
  %2358 = vrot.lane.b32.xlu0 %v1776, 4
  %v2359 = vpop.permute.xlu0 %2358
  %2360 = vrot.lane.b32.xlu0 %v1781, 4
  %v2361 = vpop.permute.xlu0 %2360
  %2362 = vrot.lane.b32.xlu0 %v1786, 4
  %v2363 = vpop.permute.xlu0 %2362
  %2364 = vrot.lane.b32.xlu0 %v1791, 4
  %v2365 = vpop.permute.xlu0 %2364
  %2366 = vrot.lane.b32.xlu0 %v1796, 4
  %v2367 = vpop.permute.xlu0 %2366
  %2368 = vrot.lane.b32.xlu0 %v1801, 4
  %v2369 = vpop.permute.xlu0 %2368
  %2370 = vrot.lane.b32.xlu0 %v1806, 4
  %v2371 = vpop.permute.xlu0 %2370
  %2372 = vrot.lane.b32.xlu0 %v1811, 4
  %v2373 = vpop.permute.xlu0 %2372
  %2374 = vrot.lane.b32.xlu0 %v1816, 4
  %v2375 = vpop.permute.xlu0 %2374
  %2376 = vrot.lane.b32.xlu0 %v1821, 4
  %v2377 = vpop.permute.xlu0 %2376
  %2378 = vrot.lane.b32.xlu0 %v1826, 4
  %v2379 = vpop.permute.xlu0 %2378
  %2380 = vrot.lane.b32.xlu0 %v1831, 4
  %v2381 = vpop.permute.xlu0 %2380
  %2382 = vrot.lane.b32.xlu0 %v1836, 4
  %v2383 = vpop.permute.xlu0 %2382
  %2384 = vrot.lane.b32.xlu0 %v1841, 4
  %v2385 = vpop.permute.xlu0 %2384
  %2386 = vrot.lane.b32.xlu0 %v1846, 4
  %v2387 = vpop.permute.xlu0 %2386
  %2388 = vrot.lane.b32.xlu0 %v1851, 4
  %v2389 = vpop.permute.xlu0 %2388
  %2390 = vrot.lane.b32.xlu0 %v1856, 4
  %v2391 = vpop.permute.xlu0 %2390
  %2392 = vrot.lane.b32.xlu0 %v1861, 4
  %v2393 = vpop.permute.xlu0 %2392
  %2394 = vrot.lane.b32.xlu0 %v1866, 4
  %v2395 = vpop.permute.xlu0 %2394
  %2396 = vrot.lane.b32.xlu0 %v1871, 4
  %v2397 = vpop.permute.xlu0 %2396
  %2398 = vrot.lane.b32.xlu0 %v1876, 4
  %v2399 = vpop.permute.xlu0 %2398
  %2400 = vrot.lane.b32.xlu0 %v1881, 4
  %v2401 = vpop.permute.xlu0 %2400
  %2402 = vrot.lane.b32.xlu0 %v1886, 4
  %v2403 = vpop.permute.xlu0 %2402
  %2404 = vrot.lane.b32.xlu0 %v1891, 4
  %v2405 = vpop.permute.xlu0 %2404
  %2406 = vrot.lane.b32.xlu0 %v1896, 4
  %v2407 = vpop.permute.xlu0 %2406
  %2408 = vrot.lane.b32.xlu0 %v1901, 4
  %v2409 = vpop.permute.xlu0 %2408
  %2410 = vrot.lane.b32.xlu0 %v1906, 4
  %v2411 = vpop.permute.xlu0 %2410
  %2412 = vrot.lane.b32.xlu0 %v1911, 4
  %v2413 = vpop.permute.xlu0 %2412
  %2414 = vrot.lane.b32.xlu0 %v1916, 4
  %v2415 = vpop.permute.xlu0 %2414
  %2416 = vrot.lane.b32.xlu0 %v1921, 4
  %v2417 = vpop.permute.xlu0 %2416
  %vm2450 = vcmask 64544
  %2451 = vst.msk [vmem:[%s14] sm:$0xff] %vm2450, %v2355
  %2452 = vst.msk [vmem:[%s14 + $0x8] sm:$0xff] %vm2450, %v2357
  %2453 = vst.msk [vmem:[%s14 + $0x10] sm:$0xff] %vm2450, %v2359
  %2454 = vst.msk [vmem:[%s14 + $0x18] sm:$0xff] %vm2450, %v2361
  %2455 = vst.msk [vmem:[%s14 + $0x20] sm:$0xff] %vm2450, %v2363
  %2456 = vst.msk [vmem:[%s14 + $0x28] sm:$0xff] %vm2450, %v2365
  %2457 = vst.msk [vmem:[%s14 + $0x30] sm:$0xff] %vm2450, %v2367
  %2458 = vst.msk [vmem:[%s14 + $0x38] sm:$0xff] %vm2450, %v2369
  %2459 = vst.msk [vmem:[%s14 + $0x40] sm:$0xff] %vm2450, %v2371
  %2460 = vst.msk [vmem:[%s14 + $0x48] sm:$0xff] %vm2450, %v2373
  %2461 = vst.msk [vmem:[%s14 + $0x50] sm:$0xff] %vm2450, %v2375
  %2462 = vst.msk [vmem:[%s14 + $0x58] sm:$0xff] %vm2450, %v2377
  %2463 = vst.msk [vmem:[%s14 + $0x60] sm:$0xff] %vm2450, %v2379
  %2464 = vst.msk [vmem:[%s14 + $0x68] sm:$0xff] %vm2450, %v2381
  %2465 = vst.msk [vmem:[%s14 + $0x70] sm:$0xff] %vm2450, %v2383
  %2466 = vst.msk [vmem:[%s14 + $0x78] sm:$0xff] %vm2450, %v2385
  %2467 = vst.msk [vmem:[%s14 + $0x80] sm:$0xff] %vm2450, %v2387
  %2468 = vst.msk [vmem:[%s14 + $0x88] sm:$0xff] %vm2450, %v2389
  %2469 = vst.msk [vmem:[%s14 + $0x90] sm:$0xff] %vm2450, %v2391
  %2470 = vst.msk [vmem:[%s14 + $0x98] sm:$0xff] %vm2450, %v2393
  %2471 = vst.msk [vmem:[%s14 + $0xa0] sm:$0xff] %vm2450, %v2395
  %2472 = vst.msk [vmem:[%s14 + $0xa8] sm:$0xff] %vm2450, %v2397
  %2473 = vst.msk [vmem:[%s14 + $0xb0] sm:$0xff] %vm2450, %v2399
  %2474 = vst.msk [vmem:[%s14 + $0xb8] sm:$0xff] %vm2450, %v2401
  %2475 = vst.msk [vmem:[%s14 + $0xc0] sm:$0xff] %vm2450, %v2403
  %2476 = vst.msk [vmem:[%s14 + $0xc8] sm:$0xff] %vm2450, %v2405
  %2477 = vst.msk [vmem:[%s14 + $0xd0] sm:$0xff] %vm2450, %v2407
  %2478 = vst.msk [vmem:[%s14 + $0xd8] sm:$0xff] %vm2450, %v2409
  %2479 = vst.msk [vmem:[%s14 + $0xe0] sm:$0xff] %vm2450, %v2411
  %2480 = vst.msk [vmem:[%s14 + $0xe8] sm:$0xff] %vm2450, %v2413
  %2481 = vst.msk [vmem:[%s14 + $0xf0] sm:$0xff] %vm2450, %v2415
  %2482 = vst.msk [vmem:[%s14 + $0xf8] sm:$0xff] %vm2450, %v2417
  %2515 = vrot.lane.b32.xlu0 %v2194, 8
  %v2516 = vpop.permute.xlu0 %2515
  %2517 = vrot.lane.b32.xlu0 %v2195, 8
  %v2518 = vpop.permute.xlu0 %2517
  %2519 = vrot.lane.b32.xlu0 %v2196, 8
  %v2520 = vpop.permute.xlu0 %2519
  %2521 = vrot.lane.b32.xlu0 %v2197, 8
  %v2522 = vpop.permute.xlu0 %2521
  %2523 = vrot.lane.b32.xlu0 %v2198, 8
  %v2524 = vpop.permute.xlu0 %2523
  %2525 = vrot.lane.b32.xlu0 %v2199, 8
  %v2526 = vpop.permute.xlu0 %2525
  %2527 = vrot.lane.b32.xlu0 %v2200, 8
  %v2528 = vpop.permute.xlu0 %2527
  %2529 = vrot.lane.b32.xlu0 %v2201, 8
  %v2530 = vpop.permute.xlu0 %2529
  %2531 = vrot.lane.b32.xlu0 %v2202, 8
  %v2532 = vpop.permute.xlu0 %2531
  %2533 = vrot.lane.b32.xlu0 %v2203, 8
  %v2534 = vpop.permute.xlu0 %2533
  %2535 = vrot.lane.b32.xlu0 %v2204, 8
  %v2536 = vpop.permute.xlu0 %2535
  %2537 = vrot.lane.b32.xlu0 %v2205, 8
  %v2538 = vpop.permute.xlu0 %2537
  %2539 = vrot.lane.b32.xlu0 %v2206, 8
  %v2540 = vpop.permute.xlu0 %2539
  %2541 = vrot.lane.b32.xlu0 %v2207, 8
  %v2542 = vpop.permute.xlu0 %2541
  %2543 = vrot.lane.b32.xlu0 %v2208, 8
  %v2544 = vpop.permute.xlu0 %2543
  %2545 = vrot.lane.b32.xlu0 %v2209, 8
  %v2546 = vpop.permute.xlu0 %2545
  %2547 = vrot.lane.b32.xlu0 %v2210, 8
  %v2548 = vpop.permute.xlu0 %2547
  %2549 = vrot.lane.b32.xlu0 %v2211, 8
  %v2550 = vpop.permute.xlu0 %2549
  %2551 = vrot.lane.b32.xlu0 %v2212, 8
  %v2552 = vpop.permute.xlu0 %2551
  %2553 = vrot.lane.b32.xlu0 %v2213, 8
  %v2554 = vpop.permute.xlu0 %2553
  %2555 = vrot.lane.b32.xlu0 %v2214, 8
  %v2556 = vpop.permute.xlu0 %2555
  %2557 = vrot.lane.b32.xlu0 %v2215, 8
  %v2558 = vpop.permute.xlu0 %2557
  %2559 = vrot.lane.b32.xlu0 %v2216, 8
  %v2560 = vpop.permute.xlu0 %2559
  %2561 = vrot.lane.b32.xlu0 %v2217, 8
  %v2562 = vpop.permute.xlu0 %2561
  %2563 = vrot.lane.b32.xlu0 %v2218, 8
  %v2564 = vpop.permute.xlu0 %2563
  %2565 = vrot.lane.b32.xlu0 %v2219, 8
  %v2566 = vpop.permute.xlu0 %2565
  %2567 = vrot.lane.b32.xlu0 %v2220, 8
  %v2568 = vpop.permute.xlu0 %2567
  %2569 = vrot.lane.b32.xlu0 %v2221, 8
  %v2570 = vpop.permute.xlu0 %2569
  %2571 = vrot.lane.b32.xlu0 %v2222, 8
  %v2572 = vpop.permute.xlu0 %2571
  %2573 = vrot.lane.b32.xlu0 %v2223, 8
  %v2574 = vpop.permute.xlu0 %2573
  %2575 = vrot.lane.b32.xlu0 %v2224, 8
  %v2576 = vpop.permute.xlu0 %2575
  %2577 = vrot.lane.b32.xlu0 %v2225, 8
  %v2578 = vpop.permute.xlu0 %2577
  %vm2611 = vcmask 72768
  %2612 = vst.msk [vmem:[%s14] sm:$0xff] %vm2611, %v2516
  %2613 = vst.msk [vmem:[%s14 + $0x8] sm:$0xff] %vm2611, %v2518
  %2614 = vst.msk [vmem:[%s14 + $0x10] sm:$0xff] %vm2611, %v2520
  %2615 = vst.msk [vmem:[%s14 + $0x18] sm:$0xff] %vm2611, %v2522
  %2616 = vst.msk [vmem:[%s14 + $0x20] sm:$0xff] %vm2611, %v2524
  %2617 = vst.msk [vmem:[%s14 + $0x28] sm:$0xff] %vm2611, %v2526
  %2618 = vst.msk [vmem:[%s14 + $0x30] sm:$0xff] %vm2611, %v2528
  %2619 = vst.msk [vmem:[%s14 + $0x38] sm:$0xff] %vm2611, %v2530
  %2620 = vst.msk [vmem:[%s14 + $0x40] sm:$0xff] %vm2611, %v2532
  %2621 = vst.msk [vmem:[%s14 + $0x48] sm:$0xff] %vm2611, %v2534
  %2622 = vst.msk [vmem:[%s14 + $0x50] sm:$0xff] %vm2611, %v2536
  %2623 = vst.msk [vmem:[%s14 + $0x58] sm:$0xff] %vm2611, %v2538
  %2624 = vst.msk [vmem:[%s14 + $0x60] sm:$0xff] %vm2611, %v2540
  %2625 = vst.msk [vmem:[%s14 + $0x68] sm:$0xff] %vm2611, %v2542
  %2626 = vst.msk [vmem:[%s14 + $0x70] sm:$0xff] %vm2611, %v2544
  %2627 = vst.msk [vmem:[%s14 + $0x78] sm:$0xff] %vm2611, %v2546
  %2628 = vst.msk [vmem:[%s14 + $0x80] sm:$0xff] %vm2611, %v2548
  %2629 = vst.msk [vmem:[%s14 + $0x88] sm:$0xff] %vm2611, %v2550
  %2630 = vst.msk [vmem:[%s14 + $0x90] sm:$0xff] %vm2611, %v2552
  %2631 = vst.msk [vmem:[%s14 + $0x98] sm:$0xff] %vm2611, %v2554
  %2632 = vst.msk [vmem:[%s14 + $0xa0] sm:$0xff] %vm2611, %v2556
  %2633 = vst.msk [vmem:[%s14 + $0xa8] sm:$0xff] %vm2611, %v2558
  %2634 = vst.msk [vmem:[%s14 + $0xb0] sm:$0xff] %vm2611, %v2560
  %2635 = vst.msk [vmem:[%s14 + $0xb8] sm:$0xff] %vm2611, %v2562
  %2636 = vst.msk [vmem:[%s14 + $0xc0] sm:$0xff] %vm2611, %v2564
  %2637 = vst.msk [vmem:[%s14 + $0xc8] sm:$0xff] %vm2611, %v2566
  %2638 = vst.msk [vmem:[%s14 + $0xd0] sm:$0xff] %vm2611, %v2568
  %2639 = vst.msk [vmem:[%s14 + $0xd8] sm:$0xff] %vm2611, %v2570
  %2640 = vst.msk [vmem:[%s14 + $0xe0] sm:$0xff] %vm2611, %v2572
  %2641 = vst.msk [vmem:[%s14 + $0xe8] sm:$0xff] %vm2611, %v2574
  %2642 = vst.msk [vmem:[%s14 + $0xf0] sm:$0xff] %vm2611, %v2576
  %2643 = vst.msk [vmem:[%s14 + $0xf8] sm:$0xff] %vm2611, %v2578
  %2676 = vrot.lane.b32.xlu0 %v2227, 9
  %v2677 = vpop.permute.xlu0 %2676
  %2678 = vrot.lane.b32.xlu0 %v2229, 9
  %v2679 = vpop.permute.xlu0 %2678
  %2680 = vrot.lane.b32.xlu0 %v2231, 9
  %v2681 = vpop.permute.xlu0 %2680
  %2682 = vrot.lane.b32.xlu0 %v2233, 9
  %v2683 = vpop.permute.xlu0 %2682
  %2684 = vrot.lane.b32.xlu0 %v2235, 9
  %v2685 = vpop.permute.xlu0 %2684
  %2686 = vrot.lane.b32.xlu0 %v2237, 9
  %v2687 = vpop.permute.xlu0 %2686
  %2688 = vrot.lane.b32.xlu0 %v2239, 9
  %v2689 = vpop.permute.xlu0 %2688
  %2690 = vrot.lane.b32.xlu0 %v2241, 9
  %v2691 = vpop.permute.xlu0 %2690
  %2692 = vrot.lane.b32.xlu0 %v2243, 9
  %v2693 = vpop.permute.xlu0 %2692
  %2694 = vrot.lane.b32.xlu0 %v2245, 9
  %v2695 = vpop.permute.xlu0 %2694
  %2696 = vrot.lane.b32.xlu0 %v2247, 9
  %v2697 = vpop.permute.xlu0 %2696
  %2698 = vrot.lane.b32.xlu0 %v2249, 9
  %v2699 = vpop.permute.xlu0 %2698
  %2700 = vrot.lane.b32.xlu0 %v2251, 9
  %v2701 = vpop.permute.xlu0 %2700
  %2702 = vrot.lane.b32.xlu0 %v2253, 9
  %v2703 = vpop.permute.xlu0 %2702
  %2704 = vrot.lane.b32.xlu0 %v2255, 9
  %v2705 = vpop.permute.xlu0 %2704
  %2706 = vrot.lane.b32.xlu0 %v2257, 9
  %v2707 = vpop.permute.xlu0 %2706
  %2708 = vrot.lane.b32.xlu0 %v2259, 9
  %v2709 = vpop.permute.xlu0 %2708
  %2710 = vrot.lane.b32.xlu0 %v2261, 9
  %v2711 = vpop.permute.xlu0 %2710
  %2712 = vrot.lane.b32.xlu0 %v2263, 9
  %v2713 = vpop.permute.xlu0 %2712
  %2714 = vrot.lane.b32.xlu0 %v2265, 9
  %v2715 = vpop.permute.xlu0 %2714
  %2716 = vrot.lane.b32.xlu0 %v2267, 9
  %v2717 = vpop.permute.xlu0 %2716
  %2718 = vrot.lane.b32.xlu0 %v2269, 9
  %v2719 = vpop.permute.xlu0 %2718
  %2720 = vrot.lane.b32.xlu0 %v2271, 9
  %v2721 = vpop.permute.xlu0 %2720
  %2722 = vrot.lane.b32.xlu0 %v2273, 9
  %v2723 = vpop.permute.xlu0 %2722
  %2724 = vrot.lane.b32.xlu0 %v2275, 9
  %v2725 = vpop.permute.xlu0 %2724
  %2726 = vrot.lane.b32.xlu0 %v2277, 9
  %v2727 = vpop.permute.xlu0 %2726
  %2728 = vrot.lane.b32.xlu0 %v2279, 9
  %v2729 = vpop.permute.xlu0 %2728
  %2730 = vrot.lane.b32.xlu0 %v2281, 9
  %v2731 = vpop.permute.xlu0 %2730
  %2732 = vrot.lane.b32.xlu0 %v2283, 9
  %v2733 = vpop.permute.xlu0 %2732
  %2734 = vrot.lane.b32.xlu0 %v2285, 9
  %v2735 = vpop.permute.xlu0 %2734
  %2736 = vrot.lane.b32.xlu0 %v2287, 9
  %v2737 = vpop.permute.xlu0 %2736
  %2738 = vrot.lane.b32.xlu0 %v2289, 9
  %v2739 = vpop.permute.xlu0 %2738
  %vm2772 = vcmask 80968
  %2773 = vst.msk [vmem:[%s14] sm:$0xff] %vm2772, %v2677
  %2774 = vst.msk [vmem:[%s14 + $0x8] sm:$0xff] %vm2772, %v2679
  %2775 = vst.msk [vmem:[%s14 + $0x10] sm:$0xff] %vm2772, %v2681
  %2776 = vst.msk [vmem:[%s14 + $0x18] sm:$0xff] %vm2772, %v2683
  %2777 = vst.msk [vmem:[%s14 + $0x20] sm:$0xff] %vm2772, %v2685
  %2778 = vst.msk [vmem:[%s14 + $0x28] sm:$0xff] %vm2772, %v2687
  %2779 = vst.msk [vmem:[%s14 + $0x30] sm:$0xff] %vm2772, %v2689
  %2780 = vst.msk [vmem:[%s14 + $0x38] sm:$0xff] %vm2772, %v2691
  %2781 = vst.msk [vmem:[%s14 + $0x40] sm:$0xff] %vm2772, %v2693
  %2782 = vst.msk [vmem:[%s14 + $0x48] sm:$0xff] %vm2772, %v2695
  %2783 = vst.msk [vmem:[%s14 + $0x50] sm:$0xff] %vm2772, %v2697
  %2784 = vst.msk [vmem:[%s14 + $0x58] sm:$0xff] %vm2772, %v2699
  %2785 = vst.msk [vmem:[%s14 + $0x60] sm:$0xff] %vm2772, %v2701
  %2786 = vst.msk [vmem:[%s14 + $0x68] sm:$0xff] %vm2772, %v2703
  %2787 = vst.msk [vmem:[%s14 + $0x70] sm:$0xff] %vm2772, %v2705
  %2788 = vst.msk [vmem:[%s14 + $0x78] sm:$0xff] %vm2772, %v2707
  %2789 = vst.msk [vmem:[%s14 + $0x80] sm:$0xff] %vm2772, %v2709
  %2790 = vst.msk [vmem:[%s14 + $0x88] sm:$0xff] %vm2772, %v2711
  %2791 = vst.msk [vmem:[%s14 + $0x90] sm:$0xff] %vm2772, %v2713
  %2792 = vst.msk [vmem:[%s14 + $0x98] sm:$0xff] %vm2772, %v2715
  %2793 = vst.msk [vmem:[%s14 + $0xa0] sm:$0xff] %vm2772, %v2717
  %2794 = vst.msk [vmem:[%s14 + $0xa8] sm:$0xff] %vm2772, %v2719
  %2795 = vst.msk [vmem:[%s14 + $0xb0] sm:$0xff] %vm2772, %v2721
  %2796 = vst.msk [vmem:[%s14 + $0xb8] sm:$0xff] %vm2772, %v2723
  %2797 = vst.msk [vmem:[%s14 + $0xc0] sm:$0xff] %vm2772, %v2725
  %2798 = vst.msk [vmem:[%s14 + $0xc8] sm:$0xff] %vm2772, %v2727
  %2799 = vst.msk [vmem:[%s14 + $0xd0] sm:$0xff] %vm2772, %v2729
  %2800 = vst.msk [vmem:[%s14 + $0xd8] sm:$0xff] %vm2772, %v2731
  %2801 = vst.msk [vmem:[%s14 + $0xe0] sm:$0xff] %vm2772, %v2733
  %2802 = vst.msk [vmem:[%s14 + $0xe8] sm:$0xff] %vm2772, %v2735
  %2803 = vst.msk [vmem:[%s14 + $0xf0] sm:$0xff] %vm2772, %v2737
  %2804 = vst.msk [vmem:[%s14 + $0xf8] sm:$0xff] %vm2772, %v2739
  // Predicated region
  $region58: #{tpu_custom_call.1} parent=0 // pred_check
    _
  $region59: #{tpu_custom_call.1} parent=0 // pred_check_branch
    %2806 = sbr.rel (0) target = $region61
  $region60: #{tpu_custom_call.1} parent=0 // pred_region
    _
  $region61: #{tpu_custom_call.1} parent=0 // pred_fallthru
    _
  // Predicated region
  $region62: #{tpu_custom_call.1} parent=0 // pred_check
    _
  $region63: #{tpu_custom_call.1} parent=0 // pred_check_branch
    %2808 = sbr.rel (0) target = $region65
  $region64: #{tpu_custom_call.1} parent=0 // pred_region
    _
  $region65: #{tpu_custom_call.1} parent=0 // pred_fallthru
    _

</llo_original>
